<compile_context>
chip_gen: v5e
topology: v5e:2x2
jax: 0.10.0
libtpu: 0.0.40
codegen_flags: <defaults>
</compile_context>

<pallas_src>
import jax
import jax.numpy as jnp
from jax.experimental import pallas as pl
from jax.experimental.pallas import tpu as pltpu


# ----------------------------------------------------------------------------
# Fused Pallas kernel (built per static T, B, D_in, H, L)
# ----------------------------------------------------------------------------
def _make_fused_kernel(T, B, D_in, H, L):
    """Kernel ref order:
       x2d, [wih_t, bi_fold, whh_t, bhn] * L, wlin_t, blin, out,
       gi_scratch (T,B,3H), seq_scratch (T,B,H)
    """

    def kernel(*refs):
        wlin_ref = refs[1 + 4 * L]
        blin_ref = refs[2 + 4 * L]
        o_ref = refs[3 + 4 * L]
        gi_ref = refs[4 + 4 * L]      # VMEM (T, B, 3H): hoisted input projection
        seq_ref = refs[5 + 4 * L]     # VMEM (T, B, H): inter-layer hidden sequence

        xv = refs[0][...]             # (B, T*D_in) -- bitcast layout of the input
        h = jnp.zeros((B, H), jnp.float32)

        for l in range(L):
            wih_ref, bi_ref, whh_ref, bhn_ref = refs[1 + 4 * l: 5 + 4 * l]
            wih = wih_ref[...]                                   # (D_l, 3H)
            whh = whh_ref[...]                                   # (H, 3H), gates [r|z|n]
            # Hoisted broadcasts: emitted once per layer, not once per step.
            bi_b = jnp.broadcast_to(bi_ref[...], (B, 3 * H))
            bhn_b = jnp.broadcast_to(bhn_ref[...], (B, H))

            # Hoisted input projection for all T steps, written to the (T,B,3H)
            # scratch so every per-step read below is a tile-aligned load.
            # (Independent of h -> off the serial critical path.)
            for t in range(T):
                if l == 0:
                    xt = xv[:, t * D_in:(t + 1) * D_in]          # (B, D_in)
                else:
                    xt = seq_ref[t]                              # (B, H), aligned
                gi_ref[t] = jnp.dot(
                    xt, wih, preferred_element_type=jnp.float32) + bi_b

            last_layer = (l == L - 1)
            h = jnp.zeros((B, H), jnp.float32)

            # Serial recurrence: ONE fused (B,H)@(H,3H) MXU dot per step; the
            # gate split is static lane slicing (XLU slot, otherwise idle).
            for t in range(T):                                   # static -> unrolled
                gt = gi_ref[t]                                   # (B, 3H), aligned
                gh = jnp.dot(h, whh, preferred_element_type=jnp.float32)
                r = jax.nn.sigmoid(gt[:, 0:H] + gh[:, 0:H])
                z = jax.nn.sigmoid(gt[:, H:2 * H] + gh[:, H:2 * H])
                n = jnp.tanh(gt[:, 2 * H:] + r * (gh[:, 2 * H:] + bhn_b))
                h = (1.0 - z) * n + z * h
                if not last_layer:
                    seq_ref[t] = h                               # aligned VMEM store

        # Final Linear fused in: only the (B, OUT) result goes back to HBM.
        o_ref[...] = jnp.dot(
            h, wlin_ref[...], preferred_element_type=jnp.float32) + blin_ref[...]

    return kernel


# ----------------------------------------------------------------------------
# One-time parameter preparation (kept OFF the per-call path)
# ----------------------------------------------------------------------------
def prepare_params(gru_params, lin_w, lin_b):
    """gru_params: list of (w_ih [3H,D_in], w_hh [3H,H], b_ih [3H], b_hh [3H]).
    Returns kernel-layout params:
      layers: tuple of (wih_t [D_in,3H], bi_fold [1,3H], whh_t [H,3H], bhn [1,H])
      wlin_t [H,OUT], blin [1,OUT]
    """
    H = gru_params[0][1].shape[1]
    OUT = lin_w.shape[0]
    layers = []
    for (w_ih, w_hh, b_ih, b_hh) in gru_params:
        wih_t = jnp.transpose(w_ih).astype(jnp.float32)                  # (D_in, 3H)
        # Fold b_ih (+ b_hh for the r/z gates) into the hoisted projection bias;
        # b_hn stays separate (it sits inside the r * (...) term).
        bi_fold = jnp.concatenate(
            [b_ih[:2 * H] + b_hh[:2 * H], b_ih[2 * H:]]
        ).reshape(1, 3 * H).astype(jnp.float32)
        whh_t = jnp.transpose(w_hh).astype(jnp.float32)                  # (H, 3H)
        bhn = b_hh[2 * H:].reshape(1, H).astype(jnp.float32)
        layers.append((wih_t, bi_fold, whh_t, bhn))
    wlin_t = jnp.transpose(lin_w).astype(jnp.float32)                    # (H, OUT)
    blin = lin_b.reshape(1, OUT).astype(jnp.float32)
    return tuple(layers), wlin_t, blin


# ----------------------------------------------------------------------------
# Forward wrapper
# ----------------------------------------------------------------------------
@jax.jit
def gru_model_forward(x_btd, prepared):
    """Mirrors gru_model.forward: x [B, T, input] -> yhat [B, output]."""
    layers, wlin_t, blin = prepared
    B, T, D_in = x_btd.shape
    L = len(layers)
    H = wlin_t.shape[0]
    OUT = wlin_t.shape[1]

    # Layout-preserving (free) reshape; the per-timestep split happens in-kernel,
    # so no transpose op / extra launch in front of the pallas_call.
    x2d = x_btd.astype(jnp.float32).reshape(B, T * D_in)

    flat_args = [x2d]
    for lp in layers:
        flat_args += list(lp)
    flat_args += [wlin_t, blin]

    vmem_spec = pl.BlockSpec(memory_space=pltpu.MemorySpace.VMEM)
    kernel = _make_fused_kernel(T, B, D_in, H, L)
    return pl.pallas_call(
        kernel,
        out_shape=jax.ShapeDtypeStruct((B, OUT), jnp.float32),
        in_specs=[vmem_spec] * len(flat_args),
        out_specs=vmem_spec,
        scratch_shapes=[
            pltpu.VMEM((T, B, 3 * H), jnp.float32),   # per-layer input projection
            pltpu.VMEM((T, B, H), jnp.float32),       # inter-layer hidden sequence
        ],
    )(*flat_args)


# ----------------------------------------------------------------------------
# Pure-JAX reference (correctness check only)
# ----------------------------------------------------------------------------
def gru_model_ref(x_btd, gru_params, lin_w, lin_b):
    h_seq = jnp.swapaxes(x_btd, 0, 1)             # [T, B, D]
    for (w_ih, w_hh, b_ih, b_hh) in gru_params:
        H = w_hh.shape[1]
        B = h_seq.shape[1]

        def step(h, x_t):
            gi = x_t @ w_ih.T + b_ih
            gh = h @ w_hh.T + b_hh
            r = jax.nn.sigmoid(gi[:, :H] + gh[:, :H])
            z = jax.nn.sigmoid(gi[:, H:2 * H] + gh[:, H:2 * H])
            n = jnp.tanh(gi[:, 2 * H:] + r * gh[:, 2 * H:])
            h_new = (1.0 - z) * n + z * h
            return h_new, h_new

        _, h_seq = jax.lax.scan(step, jnp.zeros((B, H), jnp.float32), h_seq)
    return h_seq[-1] @ lin_w.T + lin_b


# ----------------------------------------------------------------------------
# Main
# ----------------------------------------------------------------------------
if __name__ == "__main__":
    config = {"input": 4, "hidden": 32, "output": 3,
              "num_layers": 2, "dropout": 0.0}
    B, T = 2, 8
    IN, H, OUT, L = (config["input"], config["hidden"],
                     config["output"], config["num_layers"])

    key = jax.random.PRNGKey(0)
    key, xk = jax.random.split(key)
    x = jax.random.normal(xk, (B, T, IN), dtype=jnp.float32)

    # Deterministic params, uniform(-1/sqrt(H), 1/sqrt(H)) like PyTorch init.
    k = 1.0 / jnp.sqrt(jnp.float32(H))
    gru_params = []
    for layer in range(L):
        d_in = IN if layer == 0 else H
        key, k1, k2, k3, k4 = jax.random.split(key, 5)
        gru_params.append((
            jax.random.uniform(k1, (3 * H, d_in), jnp.float32, -k, k),  # w_ih
            jax.random.uniform(k2, (3 * H, H), jnp.float32, -k, k),     # w_hh
            jax.random.uniform(k3, (3 * H,), jnp.float32, -k, k),       # b_ih
            jax.random.uniform(k4, (3 * H,), jnp.float32, -k, k),       # b_hh
        ))
    key, k5, k6 = jax.random.split(key, 3)
    lin_w = jax.random.uniform(k5, (OUT, H), jnp.float32, -k, k)
    lin_b = jax.random.uniform(k6, (OUT,), jnp.float32, -k, k)

    # One-time parameter preparation (off the per-call path).
    prepared = prepare_params(gru_params, lin_w, lin_b)
    prepared = jax.block_until_ready(prepared)

    yhat = gru_model_forward(x, prepared)
    yhat = jax.block_until_ready(yhat)

    y_ref = gru_model_ref(x, gru_params, lin_w, lin_b)
    assert yhat.shape == (B, OUT), yhat.shape
    assert jnp.allclose(yhat, y_ref, rtol=1e-5, atol=1e-5), (
        f"mismatch: max abs err {jnp.max(jnp.abs(yhat - y_ref))}")

    print("KERNEL_OK")
</pallas_src>

<mosaic_0001>
module attributes {stable_mosaic.version = 11 : i64} {
  func.func @kernel(%arg0: memref<2x32xf32, #tpu.memory_space<vmem>>, %arg1: memref<4x96xf32, #tpu.memory_space<vmem>>, %arg2: memref<1x96xf32, #tpu.memory_space<vmem>>, %arg3: memref<32x96xf32, #tpu.memory_space<vmem>>, %arg4: memref<1x32xf32, #tpu.memory_space<vmem>>, %arg5: memref<32x96xf32, #tpu.memory_space<vmem>>, %arg6: memref<1x96xf32, #tpu.memory_space<vmem>>, %arg7: memref<32x96xf32, #tpu.memory_space<vmem>>, %arg8: memref<1x32xf32, #tpu.memory_space<vmem>>, %arg9: memref<32x3xf32, #tpu.memory_space<vmem>>, %arg10: memref<1x3xf32, #tpu.memory_space<vmem>>, %arg11: memref<2x3xf32, #tpu.memory_space<vmem>>, %arg12: memref<8x2x96xf32, #tpu.memory_space<vmem>>, %arg13: memref<8x2x32xf32, #tpu.memory_space<vmem>>) attributes {dimension_semantics = [], scalar_prefetch = 0 : i64, scratch_operands = 2 : i64, tpu.core_type = #tpu.core_type<tc>} {
    %c0 = arith.constant 0 : index
    %c0_0 = arith.constant 0 : index
    %0 = vector.load %arg0[%c0, %c0_0] : memref<2x32xf32, #tpu.memory_space<vmem>>, vector<2x32xf32>
    %c0_1 = arith.constant 0 : index
    %c0_2 = arith.constant 0 : index
    %1 = vector.load %arg1[%c0_1, %c0_2] : memref<4x96xf32, #tpu.memory_space<vmem>>, vector<4x96xf32>
    %c0_3 = arith.constant 0 : index
    %c0_4 = arith.constant 0 : index
    %2 = vector.load %arg3[%c0_3, %c0_4] : memref<32x96xf32, #tpu.memory_space<vmem>>, vector<32x96xf32>
    %c0_5 = arith.constant 0 : index
    %c0_6 = arith.constant 0 : index
    %3 = vector.load %arg2[%c0_5, %c0_6] : memref<1x96xf32, #tpu.memory_space<vmem>>, vector<1x96xf32>
    %4 = vector.shape_cast %3 : vector<1x96xf32> to vector<1x96xf32>
    %5 = vector.broadcast %4 : vector<1x96xf32> to vector<2x96xf32>
    %c0_7 = arith.constant 0 : index
    %c0_8 = arith.constant 0 : index
    %6 = vector.load %arg4[%c0_7, %c0_8] : memref<1x32xf32, #tpu.memory_space<vmem>>, vector<1x32xf32>
    %7 = vector.shape_cast %6 : vector<1x32xf32> to vector<1x32xf32>
    %8 = vector.broadcast %7 : vector<1x32xf32> to vector<2x32xf32>
    %9 = vector.extract_strided_slice %0 {offsets = [0, 0], sizes = [2, 4], strides = [1, 1]} : vector<2x32xf32> to vector<2x4xf32>
    %cst = arith.constant dense<0.000000e+00> : vector<2x96xf32>
    %10 = tpu.matmul %9, %1, %cst {dimension_numbers = #tpu.dot_dimension_numbers<[1], [0], [0], [1], [0, 0, 1, 1], [], []>} : vector<2x4xf32>, vector<4x96xf32>, vector<2x96xf32> -> vector<2x96xf32>
    %11 = arith.addf %10, %5 : vector<2x96xf32>
    %c0_9 = arith.constant 0 : index
    %c0_10 = arith.constant 0 : index
    %c0_11 = arith.constant 0 : index
    %12 = vector.load %arg12[%c0_9, %c0_10, %c0_11] : memref<8x2x96xf32, #tpu.memory_space<vmem>>, vector<1x2x96xf32>
    %13 = vector.shape_cast %12 : vector<1x2x96xf32> to vector<2x96xf32>
    %14 = vector.shape_cast %11 : vector<2x96xf32> to vector<1x2x96xf32>
    tpu.vector_store %arg12[%c0_9, %c0_10, %c0_11], %14 {strides = array<i32>} : memref<8x2x96xf32, #tpu.memory_space<vmem>>, vector<1x2x96xf32>,
    %15 = vector.extract_strided_slice %0 {offsets = [0, 4], sizes = [2, 4], strides = [1, 1]} : vector<2x32xf32> to vector<2x4xf32>
    %cst_12 = arith.constant dense<0.000000e+00> : vector<2x96xf32>
    %16 = tpu.matmul %15, %1, %cst_12 {dimension_numbers = #tpu.dot_dimension_numbers<[1], [0], [0], [1], [0, 0, 1, 1], [], []>} : vector<2x4xf32>, vector<4x96xf32>, vector<2x96xf32> -> vector<2x96xf32>
    %17 = arith.addf %16, %5 : vector<2x96xf32>
    %c1 = arith.constant 1 : index
    %c0_13 = arith.constant 0 : index
    %c0_14 = arith.constant 0 : index
    %18 = vector.load %arg12[%c1, %c0_13, %c0_14] : memref<8x2x96xf32, #tpu.memory_space<vmem>>, vector<1x2x96xf32>
    %19 = vector.shape_cast %18 : vector<1x2x96xf32> to vector<2x96xf32>
    %20 = vector.shape_cast %17 : vector<2x96xf32> to vector<1x2x96xf32>
    tpu.vector_store %arg12[%c1, %c0_13, %c0_14], %20 {strides = array<i32>} : memref<8x2x96xf32, #tpu.memory_space<vmem>>, vector<1x2x96xf32>,
    %21 = vector.extract_strided_slice %0 {offsets = [0, 8], sizes = [2, 4], strides = [1, 1]} : vector<2x32xf32> to vector<2x4xf32>
    %cst_15 = arith.constant dense<0.000000e+00> : vector<2x96xf32>
    %22 = tpu.matmul %21, %1, %cst_15 {dimension_numbers = #tpu.dot_dimension_numbers<[1], [0], [0], [1], [0, 0, 1, 1], [], []>} : vector<2x4xf32>, vector<4x96xf32>, vector<2x96xf32> -> vector<2x96xf32>
    %23 = arith.addf %22, %5 : vector<2x96xf32>
    %c2 = arith.constant 2 : index
    %c0_16 = arith.constant 0 : index
    %c0_17 = arith.constant 0 : index
    %24 = vector.load %arg12[%c2, %c0_16, %c0_17] : memref<8x2x96xf32, #tpu.memory_space<vmem>>, vector<1x2x96xf32>
    %25 = vector.shape_cast %24 : vector<1x2x96xf32> to vector<2x96xf32>
    %26 = vector.shape_cast %23 : vector<2x96xf32> to vector<1x2x96xf32>
    tpu.vector_store %arg12[%c2, %c0_16, %c0_17], %26 {strides = array<i32>} : memref<8x2x96xf32, #tpu.memory_space<vmem>>, vector<1x2x96xf32>,
    %27 = vector.extract_strided_slice %0 {offsets = [0, 12], sizes = [2, 4], strides = [1, 1]} : vector<2x32xf32> to vector<2x4xf32>
    %cst_18 = arith.constant dense<0.000000e+00> : vector<2x96xf32>
    %28 = tpu.matmul %27, %1, %cst_18 {dimension_numbers = #tpu.dot_dimension_numbers<[1], [0], [0], [1], [0, 0, 1, 1], [], []>} : vector<2x4xf32>, vector<4x96xf32>, vector<2x96xf32> -> vector<2x96xf32>
    %29 = arith.addf %28, %5 : vector<2x96xf32>
    %c3 = arith.constant 3 : index
    %c0_19 = arith.constant 0 : index
    %c0_20 = arith.constant 0 : index
    %30 = vector.load %arg12[%c3, %c0_19, %c0_20] : memref<8x2x96xf32, #tpu.memory_space<vmem>>, vector<1x2x96xf32>
    %31 = vector.shape_cast %30 : vector<1x2x96xf32> to vector<2x96xf32>
    %32 = vector.shape_cast %29 : vector<2x96xf32> to vector<1x2x96xf32>
    tpu.vector_store %arg12[%c3, %c0_19, %c0_20], %32 {strides = array<i32>} : memref<8x2x96xf32, #tpu.memory_space<vmem>>, vector<1x2x96xf32>,
    %33 = vector.extract_strided_slice %0 {offsets = [0, 16], sizes = [2, 4], strides = [1, 1]} : vector<2x32xf32> to vector<2x4xf32>
    %cst_21 = arith.constant dense<0.000000e+00> : vector<2x96xf32>
    %34 = tpu.matmul %33, %1, %cst_21 {dimension_numbers = #tpu.dot_dimension_numbers<[1], [0], [0], [1], [0, 0, 1, 1], [], []>} : vector<2x4xf32>, vector<4x96xf32>, vector<2x96xf32> -> vector<2x96xf32>
    %35 = arith.addf %34, %5 : vector<2x96xf32>
    %c4 = arith.constant 4 : index
    %c0_22 = arith.constant 0 : index
    %c0_23 = arith.constant 0 : index
    %36 = vector.load %arg12[%c4, %c0_22, %c0_23] : memref<8x2x96xf32, #tpu.memory_space<vmem>>, vector<1x2x96xf32>
    %37 = vector.shape_cast %36 : vector<1x2x96xf32> to vector<2x96xf32>
    %38 = vector.shape_cast %35 : vector<2x96xf32> to vector<1x2x96xf32>
    tpu.vector_store %arg12[%c4, %c0_22, %c0_23], %38 {strides = array<i32>} : memref<8x2x96xf32, #tpu.memory_space<vmem>>, vector<1x2x96xf32>,
    %39 = vector.extract_strided_slice %0 {offsets = [0, 20], sizes = [2, 4], strides = [1, 1]} : vector<2x32xf32> to vector<2x4xf32>
    %cst_24 = arith.constant dense<0.000000e+00> : vector<2x96xf32>
    %40 = tpu.matmul %39, %1, %cst_24 {dimension_numbers = #tpu.dot_dimension_numbers<[1], [0], [0], [1], [0, 0, 1, 1], [], []>} : vector<2x4xf32>, vector<4x96xf32>, vector<2x96xf32> -> vector<2x96xf32>
    %41 = arith.addf %40, %5 : vector<2x96xf32>
    %c5 = arith.constant 5 : index
    %c0_25 = arith.constant 0 : index
    %c0_26 = arith.constant 0 : index
    %42 = vector.load %arg12[%c5, %c0_25, %c0_26] : memref<8x2x96xf32, #tpu.memory_space<vmem>>, vector<1x2x96xf32>
    %43 = vector.shape_cast %42 : vector<1x2x96xf32> to vector<2x96xf32>
    %44 = vector.shape_cast %41 : vector<2x96xf32> to vector<1x2x96xf32>
    tpu.vector_store %arg12[%c5, %c0_25, %c0_26], %44 {strides = array<i32>} : memref<8x2x96xf32, #tpu.memory_space<vmem>>, vector<1x2x96xf32>,
    %45 = vector.extract_strided_slice %0 {offsets = [0, 24], sizes = [2, 4], strides = [1, 1]} : vector<2x32xf32> to vector<2x4xf32>
    %cst_27 = arith.constant dense<0.000000e+00> : vector<2x96xf32>
    %46 = tpu.matmul %45, %1, %cst_27 {dimension_numbers = #tpu.dot_dimension_numbers<[1], [0], [0], [1], [0, 0, 1, 1], [], []>} : vector<2x4xf32>, vector<4x96xf32>, vector<2x96xf32> -> vector<2x96xf32>
    %47 = arith.addf %46, %5 : vector<2x96xf32>
    %c6 = arith.constant 6 : index
    %c0_28 = arith.constant 0 : index
    %c0_29 = arith.constant 0 : index
    %48 = vector.load %arg12[%c6, %c0_28, %c0_29] : memref<8x2x96xf32, #tpu.memory_space<vmem>>, vector<1x2x96xf32>
    %49 = vector.shape_cast %48 : vector<1x2x96xf32> to vector<2x96xf32>
    %50 = vector.shape_cast %47 : vector<2x96xf32> to vector<1x2x96xf32>
    tpu.vector_store %arg12[%c6, %c0_28, %c0_29], %50 {strides = array<i32>} : memref<8x2x96xf32, #tpu.memory_space<vmem>>, vector<1x2x96xf32>,
    %51 = vector.extract_strided_slice %0 {offsets = [0, 28], sizes = [2, 4], strides = [1, 1]} : vector<2x32xf32> to vector<2x4xf32>
    %cst_30 = arith.constant dense<0.000000e+00> : vector<2x96xf32>
    %52 = tpu.matmul %51, %1, %cst_30 {dimension_numbers = #tpu.dot_dimension_numbers<[1], [0], [0], [1], [0, 0, 1, 1], [], []>} : vector<2x4xf32>, vector<4x96xf32>, vector<2x96xf32> -> vector<2x96xf32>
    %53 = arith.addf %52, %5 : vector<2x96xf32>
    %c7 = arith.constant 7 : index
    %c0_31 = arith.constant 0 : index
    %c0_32 = arith.constant 0 : index
    %54 = vector.load %arg12[%c7, %c0_31, %c0_32] : memref<8x2x96xf32, #tpu.memory_space<vmem>>, vector<1x2x96xf32>
    %55 = vector.shape_cast %54 : vector<1x2x96xf32> to vector<2x96xf32>
    %56 = vector.shape_cast %53 : vector<2x96xf32> to vector<1x2x96xf32>
    tpu.vector_store %arg12[%c7, %c0_31, %c0_32], %56 {strides = array<i32>} : memref<8x2x96xf32, #tpu.memory_space<vmem>>, vector<1x2x96xf32>,
    %cst_33 = arith.constant 0.000000e+00 : f32
    %57 = vector.broadcast %cst_33 : f32 to vector<2x32xf32>
    %c0_34 = arith.constant 0 : index
    %c0_35 = arith.constant 0 : index
    %c0_36 = arith.constant 0 : index
    %58 = vector.load %arg12[%c0_34, %c0_35, %c0_36] : memref<8x2x96xf32, #tpu.memory_space<vmem>>, vector<1x2x96xf32>
    %59 = vector.shape_cast %58 : vector<1x2x96xf32> to vector<2x96xf32>
    %cst_37 = arith.constant dense<0.000000e+00> : vector<2x96xf32>
    %60 = tpu.matmul %57, %2, %cst_37 {dimension_numbers = #tpu.dot_dimension_numbers<[1], [0], [0], [1], [0, 0, 1, 1], [], []>} : vector<2x32xf32>, vector<32x96xf32>, vector<2x96xf32> -> vector<2x96xf32>
    %61 = vector.extract_strided_slice %59 {offsets = [0, 0], sizes = [2, 32], strides = [1, 1]} : vector<2x96xf32> to vector<2x32xf32>
    %62 = vector.extract_strided_slice %60 {offsets = [0, 0], sizes = [2, 32], strides = [1, 1]} : vector<2x96xf32> to vector<2x32xf32>
    %63 = arith.addf %61, %62 : vector<2x32xf32>
    %64 = arith.negf %63 : vector<2x32xf32>
    %65 = math.exp %64 : vector<2x32xf32>
    %cst_38 = arith.constant 1.000000e+00 : f32
    %66 = vector.broadcast %cst_38 : f32 to vector<2x32xf32>
    %67 = arith.addf %66, %65 : vector<2x32xf32>
    %68 = arith.divf %66, %67 : vector<2x32xf32>
    %69 = vector.extract_strided_slice %59 {offsets = [0, 32], sizes = [2, 32], strides = [1, 1]} : vector<2x96xf32> to vector<2x32xf32>
    %70 = vector.extract_strided_slice %60 {offsets = [0, 32], sizes = [2, 32], strides = [1, 1]} : vector<2x96xf32> to vector<2x32xf32>
    %71 = arith.addf %69, %70 : vector<2x32xf32>
    %72 = arith.negf %71 : vector<2x32xf32>
    %73 = math.exp %72 : vector<2x32xf32>
    %cst_39 = arith.constant 1.000000e+00 : f32
    %74 = vector.broadcast %cst_39 : f32 to vector<2x32xf32>
    %75 = arith.addf %74, %73 : vector<2x32xf32>
    %76 = arith.divf %74, %75 : vector<2x32xf32>
    %77 = vector.extract_strided_slice %59 {offsets = [0, 64], sizes = [2, 32], strides = [1, 1]} : vector<2x96xf32> to vector<2x32xf32>
    %78 = vector.extract_strided_slice %60 {offsets = [0, 64], sizes = [2, 32], strides = [1, 1]} : vector<2x96xf32> to vector<2x32xf32>
    %79 = arith.addf %78, %8 : vector<2x32xf32>
    %80 = arith.mulf %68, %79 : vector<2x32xf32>
    %81 = arith.addf %77, %80 : vector<2x32xf32>
    %82 = math.tanh %81 : vector<2x32xf32>
    %cst_40 = arith.constant 1.000000e+00 : f32
    %83 = vector.broadcast %cst_40 : f32 to vector<2x32xf32>
    %84 = arith.subf %83, %76 : vector<2x32xf32>
    %85 = arith.mulf %84, %82 : vector<2x32xf32>
    %86 = arith.mulf %76, %57 : vector<2x32xf32>
    %87 = arith.addf %85, %86 : vector<2x32xf32>
    %c0_41 = arith.constant 0 : index
    %c0_42 = arith.constant 0 : index
    %c0_43 = arith.constant 0 : index
    %88 = vector.load %arg13[%c0_41, %c0_42, %c0_43] : memref<8x2x32xf32, #tpu.memory_space<vmem>>, vector<1x2x32xf32>
    %89 = vector.shape_cast %88 : vector<1x2x32xf32> to vector<2x32xf32>
    %90 = vector.shape_cast %87 : vector<2x32xf32> to vector<1x2x32xf32>
    tpu.vector_store %arg13[%c0_41, %c0_42, %c0_43], %90 {strides = array<i32>} : memref<8x2x32xf32, #tpu.memory_space<vmem>>, vector<1x2x32xf32>,
    %c1_44 = arith.constant 1 : index
    %c0_45 = arith.constant 0 : index
    %c0_46 = arith.constant 0 : index
    %91 = vector.load %arg12[%c1_44, %c0_45, %c0_46] : memref<8x2x96xf32, #tpu.memory_space<vmem>>, vector<1x2x96xf32>
    %92 = vector.shape_cast %91 : vector<1x2x96xf32> to vector<2x96xf32>
    %cst_47 = arith.constant dense<0.000000e+00> : vector<2x96xf32>
    %93 = tpu.matmul %87, %2, %cst_47 {dimension_numbers = #tpu.dot_dimension_numbers<[1], [0], [0], [1], [0, 0, 1, 1], [], []>} : vector<2x32xf32>, vector<32x96xf32>, vector<2x96xf32> -> vector<2x96xf32>
    %94 = vector.extract_strided_slice %92 {offsets = [0, 0], sizes = [2, 32], strides = [1, 1]} : vector<2x96xf32> to vector<2x32xf32>
    %95 = vector.extract_strided_slice %93 {offsets = [0, 0], sizes = [2, 32], strides = [1, 1]} : vector<2x96xf32> to vector<2x32xf32>
    %96 = arith.addf %94, %95 : vector<2x32xf32>
    %97 = arith.negf %96 : vector<2x32xf32>
    %98 = math.exp %97 : vector<2x32xf32>
    %cst_48 = arith.constant 1.000000e+00 : f32
    %99 = vector.broadcast %cst_48 : f32 to vector<2x32xf32>
    %100 = arith.addf %99, %98 : vector<2x32xf32>
    %101 = arith.divf %99, %100 : vector<2x32xf32>
    %102 = vector.extract_strided_slice %92 {offsets = [0, 32], sizes = [2, 32], strides = [1, 1]} : vector<2x96xf32> to vector<2x32xf32>
    %103 = vector.extract_strided_slice %93 {offsets = [0, 32], sizes = [2, 32], strides = [1, 1]} : vector<2x96xf32> to vector<2x32xf32>
    %104 = arith.addf %102, %103 : vector<2x32xf32>
    %105 = arith.negf %104 : vector<2x32xf32>
    %106 = math.exp %105 : vector<2x32xf32>
    %cst_49 = arith.constant 1.000000e+00 : f32
    %107 = vector.broadcast %cst_49 : f32 to vector<2x32xf32>
    %108 = arith.addf %107, %106 : vector<2x32xf32>
    %109 = arith.divf %107, %108 : vector<2x32xf32>
    %110 = vector.extract_strided_slice %92 {offsets = [0, 64], sizes = [2, 32], strides = [1, 1]} : vector<2x96xf32> to vector<2x32xf32>
    %111 = vector.extract_strided_slice %93 {offsets = [0, 64], sizes = [2, 32], strides = [1, 1]} : vector<2x96xf32> to vector<2x32xf32>
    %112 = arith.addf %111, %8 : vector<2x32xf32>
    %113 = arith.mulf %101, %112 : vector<2x32xf32>
    %114 = arith.addf %110, %113 : vector<2x32xf32>
    %115 = math.tanh %114 : vector<2x32xf32>
    %cst_50 = arith.constant 1.000000e+00 : f32
    %116 = vector.broadcast %cst_50 : f32 to vector<2x32xf32>
    %117 = arith.subf %116, %109 : vector<2x32xf32>
    %118 = arith.mulf %117, %115 : vector<2x32xf32>
    %119 = arith.mulf %109, %87 : vector<2x32xf32>
    %120 = arith.addf %118, %119 : vector<2x32xf32>
    %c1_51 = arith.constant 1 : index
    %c0_52 = arith.constant 0 : index
    %c0_53 = arith.constant 0 : index
    %121 = vector.load %arg13[%c1_51, %c0_52, %c0_53] : memref<8x2x32xf32, #tpu.memory_space<vmem>>, vector<1x2x32xf32>
    %122 = vector.shape_cast %121 : vector<1x2x32xf32> to vector<2x32xf32>
    %123 = vector.shape_cast %120 : vector<2x32xf32> to vector<1x2x32xf32>
    tpu.vector_store %arg13[%c1_51, %c0_52, %c0_53], %123 {strides = array<i32>} : memref<8x2x32xf32, #tpu.memory_space<vmem>>, vector<1x2x32xf32>,
    %c2_54 = arith.constant 2 : index
    %c0_55 = arith.constant 0 : index
    %c0_56 = arith.constant 0 : index
    %124 = vector.load %arg12[%c2_54, %c0_55, %c0_56] : memref<8x2x96xf32, #tpu.memory_space<vmem>>, vector<1x2x96xf32>
    %125 = vector.shape_cast %124 : vector<1x2x96xf32> to vector<2x96xf32>
    %cst_57 = arith.constant dense<0.000000e+00> : vector<2x96xf32>
    %126 = tpu.matmul %120, %2, %cst_57 {dimension_numbers = #tpu.dot_dimension_numbers<[1], [0], [0], [1], [0, 0, 1, 1], [], []>} : vector<2x32xf32>, vector<32x96xf32>, vector<2x96xf32> -> vector<2x96xf32>
    %127 = vector.extract_strided_slice %125 {offsets = [0, 0], sizes = [2, 32], strides = [1, 1]} : vector<2x96xf32> to vector<2x32xf32>
    %128 = vector.extract_strided_slice %126 {offsets = [0, 0], sizes = [2, 32], strides = [1, 1]} : vector<2x96xf32> to vector<2x32xf32>
    %129 = arith.addf %127, %128 : vector<2x32xf32>
    %130 = arith.negf %129 : vector<2x32xf32>
    %131 = math.exp %130 : vector<2x32xf32>
    %cst_58 = arith.constant 1.000000e+00 : f32
    %132 = vector.broadcast %cst_58 : f32 to vector<2x32xf32>
    %133 = arith.addf %132, %131 : vector<2x32xf32>
    %134 = arith.divf %132, %133 : vector<2x32xf32>
    %135 = vector.extract_strided_slice %125 {offsets = [0, 32], sizes = [2, 32], strides = [1, 1]} : vector<2x96xf32> to vector<2x32xf32>
    %136 = vector.extract_strided_slice %126 {offsets = [0, 32], sizes = [2, 32], strides = [1, 1]} : vector<2x96xf32> to vector<2x32xf32>
    %137 = arith.addf %135, %136 : vector<2x32xf32>
    %138 = arith.negf %137 : vector<2x32xf32>
    %139 = math.exp %138 : vector<2x32xf32>
    %cst_59 = arith.constant 1.000000e+00 : f32
    %140 = vector.broadcast %cst_59 : f32 to vector<2x32xf32>
    %141 = arith.addf %140, %139 : vector<2x32xf32>
    %142 = arith.divf %140, %141 : vector<2x32xf32>
    %143 = vector.extract_strided_slice %125 {offsets = [0, 64], sizes = [2, 32], strides = [1, 1]} : vector<2x96xf32> to vector<2x32xf32>
    %144 = vector.extract_strided_slice %126 {offsets = [0, 64], sizes = [2, 32], strides = [1, 1]} : vector<2x96xf32> to vector<2x32xf32>
    %145 = arith.addf %144, %8 : vector<2x32xf32>
    %146 = arith.mulf %134, %145 : vector<2x32xf32>
    %147 = arith.addf %143, %146 : vector<2x32xf32>
    %148 = math.tanh %147 : vector<2x32xf32>
    %cst_60 = arith.constant 1.000000e+00 : f32
    %149 = vector.broadcast %cst_60 : f32 to vector<2x32xf32>
    %150 = arith.subf %149, %142 : vector<2x32xf32>
    %151 = arith.mulf %150, %148 : vector<2x32xf32>
    %152 = arith.mulf %142, %120 : vector<2x32xf32>
    %153 = arith.addf %151, %152 : vector<2x32xf32>
    %c2_61 = arith.constant 2 : index
    %c0_62 = arith.constant 0 : index
    %c0_63 = arith.constant 0 : index
    %154 = vector.load %arg13[%c2_61, %c0_62, %c0_63] : memref<8x2x32xf32, #tpu.memory_space<vmem>>, vector<1x2x32xf32>
    %155 = vector.shape_cast %154 : vector<1x2x32xf32> to vector<2x32xf32>
    %156 = vector.shape_cast %153 : vector<2x32xf32> to vector<1x2x32xf32>
    tpu.vector_store %arg13[%c2_61, %c0_62, %c0_63], %156 {strides = array<i32>} : memref<8x2x32xf32, #tpu.memory_space<vmem>>, vector<1x2x32xf32>,
    %c3_64 = arith.constant 3 : index
    %c0_65 = arith.constant 0 : index
    %c0_66 = arith.constant 0 : index
    %157 = vector.load %arg12[%c3_64, %c0_65, %c0_66] : memref<8x2x96xf32, #tpu.memory_space<vmem>>, vector<1x2x96xf32>
    %158 = vector.shape_cast %157 : vector<1x2x96xf32> to vector<2x96xf32>
    %cst_67 = arith.constant dense<0.000000e+00> : vector<2x96xf32>
    %159 = tpu.matmul %153, %2, %cst_67 {dimension_numbers = #tpu.dot_dimension_numbers<[1], [0], [0], [1], [0, 0, 1, 1], [], []>} : vector<2x32xf32>, vector<32x96xf32>, vector<2x96xf32> -> vector<2x96xf32>
    %160 = vector.extract_strided_slice %158 {offsets = [0, 0], sizes = [2, 32], strides = [1, 1]} : vector<2x96xf32> to vector<2x32xf32>
    %161 = vector.extract_strided_slice %159 {offsets = [0, 0], sizes = [2, 32], strides = [1, 1]} : vector<2x96xf32> to vector<2x32xf32>
    %162 = arith.addf %160, %161 : vector<2x32xf32>
    %163 = arith.negf %162 : vector<2x32xf32>
    %164 = math.exp %163 : vector<2x32xf32>
    %cst_68 = arith.constant 1.000000e+00 : f32
    %165 = vector.broadcast %cst_68 : f32 to vector<2x32xf32>
    %166 = arith.addf %165, %164 : vector<2x32xf32>
    %167 = arith.divf %165, %166 : vector<2x32xf32>
    %168 = vector.extract_strided_slice %158 {offsets = [0, 32], sizes = [2, 32], strides = [1, 1]} : vector<2x96xf32> to vector<2x32xf32>
    %169 = vector.extract_strided_slice %159 {offsets = [0, 32], sizes = [2, 32], strides = [1, 1]} : vector<2x96xf32> to vector<2x32xf32>
    %170 = arith.addf %168, %169 : vector<2x32xf32>
    %171 = arith.negf %170 : vector<2x32xf32>
    %172 = math.exp %171 : vector<2x32xf32>
    %cst_69 = arith.constant 1.000000e+00 : f32
    %173 = vector.broadcast %cst_69 : f32 to vector<2x32xf32>
    %174 = arith.addf %173, %172 : vector<2x32xf32>
    %175 = arith.divf %173, %174 : vector<2x32xf32>
    %176 = vector.extract_strided_slice %158 {offsets = [0, 64], sizes = [2, 32], strides = [1, 1]} : vector<2x96xf32> to vector<2x32xf32>
    %177 = vector.extract_strided_slice %159 {offsets = [0, 64], sizes = [2, 32], strides = [1, 1]} : vector<2x96xf32> to vector<2x32xf32>
    %178 = arith.addf %177, %8 : vector<2x32xf32>
    %179 = arith.mulf %167, %178 : vector<2x32xf32>
    %180 = arith.addf %176, %179 : vector<2x32xf32>
    %181 = math.tanh %180 : vector<2x32xf32>
    %cst_70 = arith.constant 1.000000e+00 : f32
    %182 = vector.broadcast %cst_70 : f32 to vector<2x32xf32>
    %183 = arith.subf %182, %175 : vector<2x32xf32>
    %184 = arith.mulf %183, %181 : vector<2x32xf32>
    %185 = arith.mulf %175, %153 : vector<2x32xf32>
    %186 = arith.addf %184, %185 : vector<2x32xf32>
    %c3_71 = arith.constant 3 : index
    %c0_72 = arith.constant 0 : index
    %c0_73 = arith.constant 0 : index
    %187 = vector.load %arg13[%c3_71, %c0_72, %c0_73] : memref<8x2x32xf32, #tpu.memory_space<vmem>>, vector<1x2x32xf32>
    %188 = vector.shape_cast %187 : vector<1x2x32xf32> to vector<2x32xf32>
    %189 = vector.shape_cast %186 : vector<2x32xf32> to vector<1x2x32xf32>
    tpu.vector_store %arg13[%c3_71, %c0_72, %c0_73], %189 {strides = array<i32>} : memref<8x2x32xf32, #tpu.memory_space<vmem>>, vector<1x2x32xf32>,
    %c4_74 = arith.constant 4 : index
    %c0_75 = arith.constant 0 : index
    %c0_76 = arith.constant 0 : index
    %190 = vector.load %arg12[%c4_74, %c0_75, %c0_76] : memref<8x2x96xf32, #tpu.memory_space<vmem>>, vector<1x2x96xf32>
    %191 = vector.shape_cast %190 : vector<1x2x96xf32> to vector<2x96xf32>
    %cst_77 = arith.constant dense<0.000000e+00> : vector<2x96xf32>
    %192 = tpu.matmul %186, %2, %cst_77 {dimension_numbers = #tpu.dot_dimension_numbers<[1], [0], [0], [1], [0, 0, 1, 1], [], []>} : vector<2x32xf32>, vector<32x96xf32>, vector<2x96xf32> -> vector<2x96xf32>
    %193 = vector.extract_strided_slice %191 {offsets = [0, 0], sizes = [2, 32], strides = [1, 1]} : vector<2x96xf32> to vector<2x32xf32>
    %194 = vector.extract_strided_slice %192 {offsets = [0, 0], sizes = [2, 32], strides = [1, 1]} : vector<2x96xf32> to vector<2x32xf32>
    %195 = arith.addf %193, %194 : vector<2x32xf32>
    %196 = arith.negf %195 : vector<2x32xf32>
    %197 = math.exp %196 : vector<2x32xf32>
    %cst_78 = arith.constant 1.000000e+00 : f32
    %198 = vector.broadcast %cst_78 : f32 to vector<2x32xf32>
    %199 = arith.addf %198, %197 : vector<2x32xf32>
    %200 = arith.divf %198, %199 : vector<2x32xf32>
    %201 = vector.extract_strided_slice %191 {offsets = [0, 32], sizes = [2, 32], strides = [1, 1]} : vector<2x96xf32> to vector<2x32xf32>
    %202 = vector.extract_strided_slice %192 {offsets = [0, 32], sizes = [2, 32], strides = [1, 1]} : vector<2x96xf32> to vector<2x32xf32>
    %203 = arith.addf %201, %202 : vector<2x32xf32>
    %204 = arith.negf %203 : vector<2x32xf32>
    %205 = math.exp %204 : vector<2x32xf32>
    %cst_79 = arith.constant 1.000000e+00 : f32
    %206 = vector.broadcast %cst_79 : f32 to vector<2x32xf32>
    %207 = arith.addf %206, %205 : vector<2x32xf32>
    %208 = arith.divf %206, %207 : vector<2x32xf32>
    %209 = vector.extract_strided_slice %191 {offsets = [0, 64], sizes = [2, 32], strides = [1, 1]} : vector<2x96xf32> to vector<2x32xf32>
    %210 = vector.extract_strided_slice %192 {offsets = [0, 64], sizes = [2, 32], strides = [1, 1]} : vector<2x96xf32> to vector<2x32xf32>
    %211 = arith.addf %210, %8 : vector<2x32xf32>
    %212 = arith.mulf %200, %211 : vector<2x32xf32>
    %213 = arith.addf %209, %212 : vector<2x32xf32>
    %214 = math.tanh %213 : vector<2x32xf32>
    %cst_80 = arith.constant 1.000000e+00 : f32
    %215 = vector.broadcast %cst_80 : f32 to vector<2x32xf32>
    %216 = arith.subf %215, %208 : vector<2x32xf32>
    %217 = arith.mulf %216, %214 : vector<2x32xf32>
    %218 = arith.mulf %208, %186 : vector<2x32xf32>
    %219 = arith.addf %217, %218 : vector<2x32xf32>
    %c4_81 = arith.constant 4 : index
    %c0_82 = arith.constant 0 : index
    %c0_83 = arith.constant 0 : index
    %220 = vector.load %arg13[%c4_81, %c0_82, %c0_83] : memref<8x2x32xf32, #tpu.memory_space<vmem>>, vector<1x2x32xf32>
    %221 = vector.shape_cast %220 : vector<1x2x32xf32> to vector<2x32xf32>
    %222 = vector.shape_cast %219 : vector<2x32xf32> to vector<1x2x32xf32>
    tpu.vector_store %arg13[%c4_81, %c0_82, %c0_83], %222 {strides = array<i32>} : memref<8x2x32xf32, #tpu.memory_space<vmem>>, vector<1x2x32xf32>,
    %c5_84 = arith.constant 5 : index
    %c0_85 = arith.constant 0 : index
    %c0_86 = arith.constant 0 : index
    %223 = vector.load %arg12[%c5_84, %c0_85, %c0_86] : memref<8x2x96xf32, #tpu.memory_space<vmem>>, vector<1x2x96xf32>
    %224 = vector.shape_cast %223 : vector<1x2x96xf32> to vector<2x96xf32>
    %cst_87 = arith.constant dense<0.000000e+00> : vector<2x96xf32>
    %225 = tpu.matmul %219, %2, %cst_87 {dimension_numbers = #tpu.dot_dimension_numbers<[1], [0], [0], [1], [0, 0, 1, 1], [], []>} : vector<2x32xf32>, vector<32x96xf32>, vector<2x96xf32> -> vector<2x96xf32>
    %226 = vector.extract_strided_slice %224 {offsets = [0, 0], sizes = [2, 32], strides = [1, 1]} : vector<2x96xf32> to vector<2x32xf32>
    %227 = vector.extract_strided_slice %225 {offsets = [0, 0], sizes = [2, 32], strides = [1, 1]} : vector<2x96xf32> to vector<2x32xf32>
    %228 = arith.addf %226, %227 : vector<2x32xf32>
    %229 = arith.negf %228 : vector<2x32xf32>
    %230 = math.exp %229 : vector<2x32xf32>
    %cst_88 = arith.constant 1.000000e+00 : f32
    %231 = vector.broadcast %cst_88 : f32 to vector<2x32xf32>
    %232 = arith.addf %231, %230 : vector<2x32xf32>
    %233 = arith.divf %231, %232 : vector<2x32xf32>
    %234 = vector.extract_strided_slice %224 {offsets = [0, 32], sizes = [2, 32], strides = [1, 1]} : vector<2x96xf32> to vector<2x32xf32>
    %235 = vector.extract_strided_slice %225 {offsets = [0, 32], sizes = [2, 32], strides = [1, 1]} : vector<2x96xf32> to vector<2x32xf32>
    %236 = arith.addf %234, %235 : vector<2x32xf32>
    %237 = arith.negf %236 : vector<2x32xf32>
    %238 = math.exp %237 : vector<2x32xf32>
    %cst_89 = arith.constant 1.000000e+00 : f32
    %239 = vector.broadcast %cst_89 : f32 to vector<2x32xf32>
    %240 = arith.addf %239, %238 : vector<2x32xf32>
    %241 = arith.divf %239, %240 : vector<2x32xf32>
    %242 = vector.extract_strided_slice %224 {offsets = [0, 64], sizes = [2, 32], strides = [1, 1]} : vector<2x96xf32> to vector<2x32xf32>
    %243 = vector.extract_strided_slice %225 {offsets = [0, 64], sizes = [2, 32], strides = [1, 1]} : vector<2x96xf32> to vector<2x32xf32>
    %244 = arith.addf %243, %8 : vector<2x32xf32>
    %245 = arith.mulf %233, %244 : vector<2x32xf32>
    %246 = arith.addf %242, %245 : vector<2x32xf32>
    %247 = math.tanh %246 : vector<2x32xf32>
    %cst_90 = arith.constant 1.000000e+00 : f32
    %248 = vector.broadcast %cst_90 : f32 to vector<2x32xf32>
    %249 = arith.subf %248, %241 : vector<2x32xf32>
    %250 = arith.mulf %249, %247 : vector<2x32xf32>
    %251 = arith.mulf %241, %219 : vector<2x32xf32>
    %252 = arith.addf %250, %251 : vector<2x32xf32>
    %c5_91 = arith.constant 5 : index
    %c0_92 = arith.constant 0 : index
    %c0_93 = arith.constant 0 : index
    %253 = vector.load %arg13[%c5_91, %c0_92, %c0_93] : memref<8x2x32xf32, #tpu.memory_space<vmem>>, vector<1x2x32xf32>
    %254 = vector.shape_cast %253 : vector<1x2x32xf32> to vector<2x32xf32>
    %255 = vector.shape_cast %252 : vector<2x32xf32> to vector<1x2x32xf32>
    tpu.vector_store %arg13[%c5_91, %c0_92, %c0_93], %255 {strides = array<i32>} : memref<8x2x32xf32, #tpu.memory_space<vmem>>, vector<1x2x32xf32>,
    %c6_94 = arith.constant 6 : index
    %c0_95 = arith.constant 0 : index
    %c0_96 = arith.constant 0 : index
    %256 = vector.load %arg12[%c6_94, %c0_95, %c0_96] : memref<8x2x96xf32, #tpu.memory_space<vmem>>, vector<1x2x96xf32>
    %257 = vector.shape_cast %256 : vector<1x2x96xf32> to vector<2x96xf32>
    %cst_97 = arith.constant dense<0.000000e+00> : vector<2x96xf32>
    %258 = tpu.matmul %252, %2, %cst_97 {dimension_numbers = #tpu.dot_dimension_numbers<[1], [0], [0], [1], [0, 0, 1, 1], [], []>} : vector<2x32xf32>, vector<32x96xf32>, vector<2x96xf32> -> vector<2x96xf32>
    %259 = vector.extract_strided_slice %257 {offsets = [0, 0], sizes = [2, 32], strides = [1, 1]} : vector<2x96xf32> to vector<2x32xf32>
    %260 = vector.extract_strided_slice %258 {offsets = [0, 0], sizes = [2, 32], strides = [1, 1]} : vector<2x96xf32> to vector<2x32xf32>
    %261 = arith.addf %259, %260 : vector<2x32xf32>
    %262 = arith.negf %261 : vector<2x32xf32>
    %263 = math.exp %262 : vector<2x32xf32>
    %cst_98 = arith.constant 1.000000e+00 : f32
    %264 = vector.broadcast %cst_98 : f32 to vector<2x32xf32>
    %265 = arith.addf %264, %263 : vector<2x32xf32>
    %266 = arith.divf %264, %265 : vector<2x32xf32>
    %267 = vector.extract_strided_slice %257 {offsets = [0, 32], sizes = [2, 32], strides = [1, 1]} : vector<2x96xf32> to vector<2x32xf32>
    %268 = vector.extract_strided_slice %258 {offsets = [0, 32], sizes = [2, 32], strides = [1, 1]} : vector<2x96xf32> to vector<2x32xf32>
    %269 = arith.addf %267, %268 : vector<2x32xf32>
    %270 = arith.negf %269 : vector<2x32xf32>
    %271 = math.exp %270 : vector<2x32xf32>
    %cst_99 = arith.constant 1.000000e+00 : f32
    %272 = vector.broadcast %cst_99 : f32 to vector<2x32xf32>
    %273 = arith.addf %272, %271 : vector<2x32xf32>
    %274 = arith.divf %272, %273 : vector<2x32xf32>
    %275 = vector.extract_strided_slice %257 {offsets = [0, 64], sizes = [2, 32], strides = [1, 1]} : vector<2x96xf32> to vector<2x32xf32>
    %276 = vector.extract_strided_slice %258 {offsets = [0, 64], sizes = [2, 32], strides = [1, 1]} : vector<2x96xf32> to vector<2x32xf32>
    %277 = arith.addf %276, %8 : vector<2x32xf32>
    %278 = arith.mulf %266, %277 : vector<2x32xf32>
    %279 = arith.addf %275, %278 : vector<2x32xf32>
    %280 = math.tanh %279 : vector<2x32xf32>
    %cst_100 = arith.constant 1.000000e+00 : f32
    %281 = vector.broadcast %cst_100 : f32 to vector<2x32xf32>
    %282 = arith.subf %281, %274 : vector<2x32xf32>
    %283 = arith.mulf %282, %280 : vector<2x32xf32>
    %284 = arith.mulf %274, %252 : vector<2x32xf32>
    %285 = arith.addf %283, %284 : vector<2x32xf32>
    %c6_101 = arith.constant 6 : index
    %c0_102 = arith.constant 0 : index
    %c0_103 = arith.constant 0 : index
    %286 = vector.load %arg13[%c6_101, %c0_102, %c0_103] : memref<8x2x32xf32, #tpu.memory_space<vmem>>, vector<1x2x32xf32>
    %287 = vector.shape_cast %286 : vector<1x2x32xf32> to vector<2x32xf32>
    %288 = vector.shape_cast %285 : vector<2x32xf32> to vector<1x2x32xf32>
    tpu.vector_store %arg13[%c6_101, %c0_102, %c0_103], %288 {strides = array<i32>} : memref<8x2x32xf32, #tpu.memory_space<vmem>>, vector<1x2x32xf32>,
    %c7_104 = arith.constant 7 : index
    %c0_105 = arith.constant 0 : index
    %c0_106 = arith.constant 0 : index
    %289 = vector.load %arg12[%c7_104, %c0_105, %c0_106] : memref<8x2x96xf32, #tpu.memory_space<vmem>>, vector<1x2x96xf32>
    %290 = vector.shape_cast %289 : vector<1x2x96xf32> to vector<2x96xf32>
    %cst_107 = arith.constant dense<0.000000e+00> : vector<2x96xf32>
    %291 = tpu.matmul %285, %2, %cst_107 {dimension_numbers = #tpu.dot_dimension_numbers<[1], [0], [0], [1], [0, 0, 1, 1], [], []>} : vector<2x32xf32>, vector<32x96xf32>, vector<2x96xf32> -> vector<2x96xf32>
    %292 = vector.extract_strided_slice %290 {offsets = [0, 0], sizes = [2, 32], strides = [1, 1]} : vector<2x96xf32> to vector<2x32xf32>
    %293 = vector.extract_strided_slice %291 {offsets = [0, 0], sizes = [2, 32], strides = [1, 1]} : vector<2x96xf32> to vector<2x32xf32>
    %294 = arith.addf %292, %293 : vector<2x32xf32>
    %295 = arith.negf %294 : vector<2x32xf32>
    %296 = math.exp %295 : vector<2x32xf32>
    %cst_108 = arith.constant 1.000000e+00 : f32
    %297 = vector.broadcast %cst_108 : f32 to vector<2x32xf32>
    %298 = arith.addf %297, %296 : vector<2x32xf32>
    %299 = arith.divf %297, %298 : vector<2x32xf32>
    %300 = vector.extract_strided_slice %290 {offsets = [0, 32], sizes = [2, 32], strides = [1, 1]} : vector<2x96xf32> to vector<2x32xf32>
    %301 = vector.extract_strided_slice %291 {offsets = [0, 32], sizes = [2, 32], strides = [1, 1]} : vector<2x96xf32> to vector<2x32xf32>
    %302 = arith.addf %300, %301 : vector<2x32xf32>
    %303 = arith.negf %302 : vector<2x32xf32>
    %304 = math.exp %303 : vector<2x32xf32>
    %cst_109 = arith.constant 1.000000e+00 : f32
    %305 = vector.broadcast %cst_109 : f32 to vector<2x32xf32>
    %306 = arith.addf %305, %304 : vector<2x32xf32>
    %307 = arith.divf %305, %306 : vector<2x32xf32>
    %308 = vector.extract_strided_slice %290 {offsets = [0, 64], sizes = [2, 32], strides = [1, 1]} : vector<2x96xf32> to vector<2x32xf32>
    %309 = vector.extract_strided_slice %291 {offsets = [0, 64], sizes = [2, 32], strides = [1, 1]} : vector<2x96xf32> to vector<2x32xf32>
    %310 = arith.addf %309, %8 : vector<2x32xf32>
    %311 = arith.mulf %299, %310 : vector<2x32xf32>
    %312 = arith.addf %308, %311 : vector<2x32xf32>
    %313 = math.tanh %312 : vector<2x32xf32>
    %cst_110 = arith.constant 1.000000e+00 : f32
    %314 = vector.broadcast %cst_110 : f32 to vector<2x32xf32>
    %315 = arith.subf %314, %307 : vector<2x32xf32>
    %316 = arith.mulf %315, %313 : vector<2x32xf32>
    %317 = arith.mulf %307, %285 : vector<2x32xf32>
    %318 = arith.addf %316, %317 : vector<2x32xf32>
    %c7_111 = arith.constant 7 : index
    %c0_112 = arith.constant 0 : index
    %c0_113 = arith.constant 0 : index
    %319 = vector.load %arg13[%c7_111, %c0_112, %c0_113] : memref<8x2x32xf32, #tpu.memory_space<vmem>>, vector<1x2x32xf32>
    %320 = vector.shape_cast %319 : vector<1x2x32xf32> to vector<2x32xf32>
    %321 = vector.shape_cast %318 : vector<2x32xf32> to vector<1x2x32xf32>
    tpu.vector_store %arg13[%c7_111, %c0_112, %c0_113], %321 {strides = array<i32>} : memref<8x2x32xf32, #tpu.memory_space<vmem>>, vector<1x2x32xf32>,
    %c0_114 = arith.constant 0 : index
    %c0_115 = arith.constant 0 : index
    %322 = vector.load %arg5[%c0_114, %c0_115] : memref<32x96xf32, #tpu.memory_space<vmem>>, vector<32x96xf32>
    %c0_116 = arith.constant 0 : index
    %c0_117 = arith.constant 0 : index
    %323 = vector.load %arg7[%c0_116, %c0_117] : memref<32x96xf32, #tpu.memory_space<vmem>>, vector<32x96xf32>
    %c0_118 = arith.constant 0 : index
    %c0_119 = arith.constant 0 : index
    %324 = vector.load %arg6[%c0_118, %c0_119] : memref<1x96xf32, #tpu.memory_space<vmem>>, vector<1x96xf32>
    %325 = vector.shape_cast %324 : vector<1x96xf32> to vector<1x96xf32>
    %326 = vector.broadcast %325 : vector<1x96xf32> to vector<2x96xf32>
    %c0_120 = arith.constant 0 : index
    %c0_121 = arith.constant 0 : index
    %327 = vector.load %arg8[%c0_120, %c0_121] : memref<1x32xf32, #tpu.memory_space<vmem>>, vector<1x32xf32>
    %328 = vector.shape_cast %327 : vector<1x32xf32> to vector<1x32xf32>
    %329 = vector.broadcast %328 : vector<1x32xf32> to vector<2x32xf32>
    %c0_122 = arith.constant 0 : index
    %c0_123 = arith.constant 0 : index
    %c0_124 = arith.constant 0 : index
    %330 = vector.load %arg13[%c0_122, %c0_123, %c0_124] : memref<8x2x32xf32, #tpu.memory_space<vmem>>, vector<1x2x32xf32>
    %331 = vector.shape_cast %330 : vector<1x2x32xf32> to vector<2x32xf32>
    %cst_125 = arith.constant dense<0.000000e+00> : vector<2x96xf32>
    %332 = tpu.matmul %331, %322, %cst_125 {dimension_numbers = #tpu.dot_dimension_numbers<[1], [0], [0], [1], [0, 0, 1, 1], [], []>} : vector<2x32xf32>, vector<32x96xf32>, vector<2x96xf32> -> vector<2x96xf32>
    %333 = arith.addf %332, %326 : vector<2x96xf32>
    %c0_126 = arith.constant 0 : index
    %c0_127 = arith.constant 0 : index
    %c0_128 = arith.constant 0 : index
    %334 = vector.load %arg12[%c0_126, %c0_127, %c0_128] : memref<8x2x96xf32, #tpu.memory_space<vmem>>, vector<1x2x96xf32>
    %335 = vector.shape_cast %334 : vector<1x2x96xf32> to vector<2x96xf32>
    %336 = vector.shape_cast %333 : vector<2x96xf32> to vector<1x2x96xf32>
    tpu.vector_store %arg12[%c0_126, %c0_127, %c0_128], %336 {strides = array<i32>} : memref<8x2x96xf32, #tpu.memory_space<vmem>>, vector<1x2x96xf32>,
    %c1_129 = arith.constant 1 : index
    %c0_130 = arith.constant 0 : index
    %c0_131 = arith.constant 0 : index
    %337 = vector.load %arg13[%c1_129, %c0_130, %c0_131] : memref<8x2x32xf32, #tpu.memory_space<vmem>>, vector<1x2x32xf32>
    %338 = vector.shape_cast %337 : vector<1x2x32xf32> to vector<2x32xf32>
    %cst_132 = arith.constant dense<0.000000e+00> : vector<2x96xf32>
    %339 = tpu.matmul %338, %322, %cst_132 {dimension_numbers = #tpu.dot_dimension_numbers<[1], [0], [0], [1], [0, 0, 1, 1], [], []>} : vector<2x32xf32>, vector<32x96xf32>, vector<2x96xf32> -> vector<2x96xf32>
    %340 = arith.addf %339, %326 : vector<2x96xf32>
    %c1_133 = arith.constant 1 : index
    %c0_134 = arith.constant 0 : index
    %c0_135 = arith.constant 0 : index
    %341 = vector.load %arg12[%c1_133, %c0_134, %c0_135] : memref<8x2x96xf32, #tpu.memory_space<vmem>>, vector<1x2x96xf32>
    %342 = vector.shape_cast %341 : vector<1x2x96xf32> to vector<2x96xf32>
    %343 = vector.shape_cast %340 : vector<2x96xf32> to vector<1x2x96xf32>
    tpu.vector_store %arg12[%c1_133, %c0_134, %c0_135], %343 {strides = array<i32>} : memref<8x2x96xf32, #tpu.memory_space<vmem>>, vector<1x2x96xf32>,
    %c2_136 = arith.constant 2 : index
    %c0_137 = arith.constant 0 : index
    %c0_138 = arith.constant 0 : index
    %344 = vector.load %arg13[%c2_136, %c0_137, %c0_138] : memref<8x2x32xf32, #tpu.memory_space<vmem>>, vector<1x2x32xf32>
    %345 = vector.shape_cast %344 : vector<1x2x32xf32> to vector<2x32xf32>
    %cst_139 = arith.constant dense<0.000000e+00> : vector<2x96xf32>
    %346 = tpu.matmul %345, %322, %cst_139 {dimension_numbers = #tpu.dot_dimension_numbers<[1], [0], [0], [1], [0, 0, 1, 1], [], []>} : vector<2x32xf32>, vector<32x96xf32>, vector<2x96xf32> -> vector<2x96xf32>
    %347 = arith.addf %346, %326 : vector<2x96xf32>
    %c2_140 = arith.constant 2 : index
    %c0_141 = arith.constant 0 : index
    %c0_142 = arith.constant 0 : index
    %348 = vector.load %arg12[%c2_140, %c0_141, %c0_142] : memref<8x2x96xf32, #tpu.memory_space<vmem>>, vector<1x2x96xf32>
    %349 = vector.shape_cast %348 : vector<1x2x96xf32> to vector<2x96xf32>
    %350 = vector.shape_cast %347 : vector<2x96xf32> to vector<1x2x96xf32>
    tpu.vector_store %arg12[%c2_140, %c0_141, %c0_142], %350 {strides = array<i32>} : memref<8x2x96xf32, #tpu.memory_space<vmem>>, vector<1x2x96xf32>,
    %c3_143 = arith.constant 3 : index
    %c0_144 = arith.constant 0 : index
    %c0_145 = arith.constant 0 : index
    %351 = vector.load %arg13[%c3_143, %c0_144, %c0_145] : memref<8x2x32xf32, #tpu.memory_space<vmem>>, vector<1x2x32xf32>
    %352 = vector.shape_cast %351 : vector<1x2x32xf32> to vector<2x32xf32>
    %cst_146 = arith.constant dense<0.000000e+00> : vector<2x96xf32>
    %353 = tpu.matmul %352, %322, %cst_146 {dimension_numbers = #tpu.dot_dimension_numbers<[1], [0], [0], [1], [0, 0, 1, 1], [], []>} : vector<2x32xf32>, vector<32x96xf32>, vector<2x96xf32> -> vector<2x96xf32>
    %354 = arith.addf %353, %326 : vector<2x96xf32>
    %c3_147 = arith.constant 3 : index
    %c0_148 = arith.constant 0 : index
    %c0_149 = arith.constant 0 : index
    %355 = vector.load %arg12[%c3_147, %c0_148, %c0_149] : memref<8x2x96xf32, #tpu.memory_space<vmem>>, vector<1x2x96xf32>
    %356 = vector.shape_cast %355 : vector<1x2x96xf32> to vector<2x96xf32>
    %357 = vector.shape_cast %354 : vector<2x96xf32> to vector<1x2x96xf32>
    tpu.vector_store %arg12[%c3_147, %c0_148, %c0_149], %357 {strides = array<i32>} : memref<8x2x96xf32, #tpu.memory_space<vmem>>, vector<1x2x96xf32>,
    %c4_150 = arith.constant 4 : index
    %c0_151 = arith.constant 0 : index
    %c0_152 = arith.constant 0 : index
    %358 = vector.load %arg13[%c4_150, %c0_151, %c0_152] : memref<8x2x32xf32, #tpu.memory_space<vmem>>, vector<1x2x32xf32>
    %359 = vector.shape_cast %358 : vector<1x2x32xf32> to vector<2x32xf32>
    %cst_153 = arith.constant dense<0.000000e+00> : vector<2x96xf32>
    %360 = tpu.matmul %359, %322, %cst_153 {dimension_numbers = #tpu.dot_dimension_numbers<[1], [0], [0], [1], [0, 0, 1, 1], [], []>} : vector<2x32xf32>, vector<32x96xf32>, vector<2x96xf32> -> vector<2x96xf32>
    %361 = arith.addf %360, %326 : vector<2x96xf32>
    %c4_154 = arith.constant 4 : index
    %c0_155 = arith.constant 0 : index
    %c0_156 = arith.constant 0 : index
    %362 = vector.load %arg12[%c4_154, %c0_155, %c0_156] : memref<8x2x96xf32, #tpu.memory_space<vmem>>, vector<1x2x96xf32>
    %363 = vector.shape_cast %362 : vector<1x2x96xf32> to vector<2x96xf32>
    %364 = vector.shape_cast %361 : vector<2x96xf32> to vector<1x2x96xf32>
    tpu.vector_store %arg12[%c4_154, %c0_155, %c0_156], %364 {strides = array<i32>} : memref<8x2x96xf32, #tpu.memory_space<vmem>>, vector<1x2x96xf32>,
    %c5_157 = arith.constant 5 : index
    %c0_158 = arith.constant 0 : index
    %c0_159 = arith.constant 0 : index
    %365 = vector.load %arg13[%c5_157, %c0_158, %c0_159] : memref<8x2x32xf32, #tpu.memory_space<vmem>>, vector<1x2x32xf32>
    %366 = vector.shape_cast %365 : vector<1x2x32xf32> to vector<2x32xf32>
    %cst_160 = arith.constant dense<0.000000e+00> : vector<2x96xf32>
    %367 = tpu.matmul %366, %322, %cst_160 {dimension_numbers = #tpu.dot_dimension_numbers<[1], [0], [0], [1], [0, 0, 1, 1], [], []>} : vector<2x32xf32>, vector<32x96xf32>, vector<2x96xf32> -> vector<2x96xf32>
    %368 = arith.addf %367, %326 : vector<2x96xf32>
    %c5_161 = arith.constant 5 : index
    %c0_162 = arith.constant 0 : index
    %c0_163 = arith.constant 0 : index
    %369 = vector.load %arg12[%c5_161, %c0_162, %c0_163] : memref<8x2x96xf32, #tpu.memory_space<vmem>>, vector<1x2x96xf32>
    %370 = vector.shape_cast %369 : vector<1x2x96xf32> to vector<2x96xf32>
    %371 = vector.shape_cast %368 : vector<2x96xf32> to vector<1x2x96xf32>
    tpu.vector_store %arg12[%c5_161, %c0_162, %c0_163], %371 {strides = array<i32>} : memref<8x2x96xf32, #tpu.memory_space<vmem>>, vector<1x2x96xf32>,
    %c6_164 = arith.constant 6 : index
    %c0_165 = arith.constant 0 : index
    %c0_166 = arith.constant 0 : index
    %372 = vector.load %arg13[%c6_164, %c0_165, %c0_166] : memref<8x2x32xf32, #tpu.memory_space<vmem>>, vector<1x2x32xf32>
    %373 = vector.shape_cast %372 : vector<1x2x32xf32> to vector<2x32xf32>
    %cst_167 = arith.constant dense<0.000000e+00> : vector<2x96xf32>
    %374 = tpu.matmul %373, %322, %cst_167 {dimension_numbers = #tpu.dot_dimension_numbers<[1], [0], [0], [1], [0, 0, 1, 1], [], []>} : vector<2x32xf32>, vector<32x96xf32>, vector<2x96xf32> -> vector<2x96xf32>
    %375 = arith.addf %374, %326 : vector<2x96xf32>
    %c6_168 = arith.constant 6 : index
    %c0_169 = arith.constant 0 : index
    %c0_170 = arith.constant 0 : index
    %376 = vector.load %arg12[%c6_168, %c0_169, %c0_170] : memref<8x2x96xf32, #tpu.memory_space<vmem>>, vector<1x2x96xf32>
    %377 = vector.shape_cast %376 : vector<1x2x96xf32> to vector<2x96xf32>
    %378 = vector.shape_cast %375 : vector<2x96xf32> to vector<1x2x96xf32>
    tpu.vector_store %arg12[%c6_168, %c0_169, %c0_170], %378 {strides = array<i32>} : memref<8x2x96xf32, #tpu.memory_space<vmem>>, vector<1x2x96xf32>,
    %c7_171 = arith.constant 7 : index
    %c0_172 = arith.constant 0 : index
    %c0_173 = arith.constant 0 : index
    %379 = vector.load %arg13[%c7_171, %c0_172, %c0_173] : memref<8x2x32xf32, #tpu.memory_space<vmem>>, vector<1x2x32xf32>
    %380 = vector.shape_cast %379 : vector<1x2x32xf32> to vector<2x32xf32>
    %cst_174 = arith.constant dense<0.000000e+00> : vector<2x96xf32>
    %381 = tpu.matmul %380, %322, %cst_174 {dimension_numbers = #tpu.dot_dimension_numbers<[1], [0], [0], [1], [0, 0, 1, 1], [], []>} : vector<2x32xf32>, vector<32x96xf32>, vector<2x96xf32> -> vector<2x96xf32>
    %382 = arith.addf %381, %326 : vector<2x96xf32>
    %c7_175 = arith.constant 7 : index
    %c0_176 = arith.constant 0 : index
    %c0_177 = arith.constant 0 : index
    %383 = vector.load %arg12[%c7_175, %c0_176, %c0_177] : memref<8x2x96xf32, #tpu.memory_space<vmem>>, vector<1x2x96xf32>
    %384 = vector.shape_cast %383 : vector<1x2x96xf32> to vector<2x96xf32>
    %385 = vector.shape_cast %382 : vector<2x96xf32> to vector<1x2x96xf32>
    tpu.vector_store %arg12[%c7_175, %c0_176, %c0_177], %385 {strides = array<i32>} : memref<8x2x96xf32, #tpu.memory_space<vmem>>, vector<1x2x96xf32>,
    %cst_178 = arith.constant 0.000000e+00 : f32
    %386 = vector.broadcast %cst_178 : f32 to vector<2x32xf32>
    %c0_179 = arith.constant 0 : index
    %c0_180 = arith.constant 0 : index
    %c0_181 = arith.constant 0 : index
    %387 = vector.load %arg12[%c0_179, %c0_180, %c0_181] : memref<8x2x96xf32, #tpu.memory_space<vmem>>, vector<1x2x96xf32>
    %388 = vector.shape_cast %387 : vector<1x2x96xf32> to vector<2x96xf32>
    %cst_182 = arith.constant dense<0.000000e+00> : vector<2x96xf32>
    %389 = tpu.matmul %386, %323, %cst_182 {dimension_numbers = #tpu.dot_dimension_numbers<[1], [0], [0], [1], [0, 0, 1, 1], [], []>} : vector<2x32xf32>, vector<32x96xf32>, vector<2x96xf32> -> vector<2x96xf32>
    %390 = vector.extract_strided_slice %388 {offsets = [0, 0], sizes = [2, 32], strides = [1, 1]} : vector<2x96xf32> to vector<2x32xf32>
    %391 = vector.extract_strided_slice %389 {offsets = [0, 0], sizes = [2, 32], strides = [1, 1]} : vector<2x96xf32> to vector<2x32xf32>
    %392 = arith.addf %390, %391 : vector<2x32xf32>
    %393 = arith.negf %392 : vector<2x32xf32>
    %394 = math.exp %393 : vector<2x32xf32>
    %cst_183 = arith.constant 1.000000e+00 : f32
    %395 = vector.broadcast %cst_183 : f32 to vector<2x32xf32>
    %396 = arith.addf %395, %394 : vector<2x32xf32>
    %397 = arith.divf %395, %396 : vector<2x32xf32>
    %398 = vector.extract_strided_slice %388 {offsets = [0, 32], sizes = [2, 32], strides = [1, 1]} : vector<2x96xf32> to vector<2x32xf32>
    %399 = vector.extract_strided_slice %389 {offsets = [0, 32], sizes = [2, 32], strides = [1, 1]} : vector<2x96xf32> to vector<2x32xf32>
    %400 = arith.addf %398, %399 : vector<2x32xf32>
    %401 = arith.negf %400 : vector<2x32xf32>
    %402 = math.exp %401 : vector<2x32xf32>
    %cst_184 = arith.constant 1.000000e+00 : f32
    %403 = vector.broadcast %cst_184 : f32 to vector<2x32xf32>
    %404 = arith.addf %403, %402 : vector<2x32xf32>
    %405 = arith.divf %403, %404 : vector<2x32xf32>
    %406 = vector.extract_strided_slice %388 {offsets = [0, 64], sizes = [2, 32], strides = [1, 1]} : vector<2x96xf32> to vector<2x32xf32>
    %407 = vector.extract_strided_slice %389 {offsets = [0, 64], sizes = [2, 32], strides = [1, 1]} : vector<2x96xf32> to vector<2x32xf32>
    %408 = arith.addf %407, %329 : vector<2x32xf32>
    %409 = arith.mulf %397, %408 : vector<2x32xf32>
    %410 = arith.addf %406, %409 : vector<2x32xf32>
    %411 = math.tanh %410 : vector<2x32xf32>
    %cst_185 = arith.constant 1.000000e+00 : f32
    %412 = vector.broadcast %cst_185 : f32 to vector<2x32xf32>
    %413 = arith.subf %412, %405 : vector<2x32xf32>
    %414 = arith.mulf %413, %411 : vector<2x32xf32>
    %415 = arith.mulf %405, %386 : vector<2x32xf32>
    %416 = arith.addf %414, %415 : vector<2x32xf32>
    %c1_186 = arith.constant 1 : index
    %c0_187 = arith.constant 0 : index
    %c0_188 = arith.constant 0 : index
    %417 = vector.load %arg12[%c1_186, %c0_187, %c0_188] : memref<8x2x96xf32, #tpu.memory_space<vmem>>, vector<1x2x96xf32>
    %418 = vector.shape_cast %417 : vector<1x2x96xf32> to vector<2x96xf32>
    %cst_189 = arith.constant dense<0.000000e+00> : vector<2x96xf32>
    %419 = tpu.matmul %416, %323, %cst_189 {dimension_numbers = #tpu.dot_dimension_numbers<[1], [0], [0], [1], [0, 0, 1, 1], [], []>} : vector<2x32xf32>, vector<32x96xf32>, vector<2x96xf32> -> vector<2x96xf32>
    %420 = vector.extract_strided_slice %418 {offsets = [0, 0], sizes = [2, 32], strides = [1, 1]} : vector<2x96xf32> to vector<2x32xf32>
    %421 = vector.extract_strided_slice %419 {offsets = [0, 0], sizes = [2, 32], strides = [1, 1]} : vector<2x96xf32> to vector<2x32xf32>
    %422 = arith.addf %420, %421 : vector<2x32xf32>
    %423 = arith.negf %422 : vector<2x32xf32>
    %424 = math.exp %423 : vector<2x32xf32>
    %cst_190 = arith.constant 1.000000e+00 : f32
    %425 = vector.broadcast %cst_190 : f32 to vector<2x32xf32>
    %426 = arith.addf %425, %424 : vector<2x32xf32>
    %427 = arith.divf %425, %426 : vector<2x32xf32>
    %428 = vector.extract_strided_slice %418 {offsets = [0, 32], sizes = [2, 32], strides = [1, 1]} : vector<2x96xf32> to vector<2x32xf32>
    %429 = vector.extract_strided_slice %419 {offsets = [0, 32], sizes = [2, 32], strides = [1, 1]} : vector<2x96xf32> to vector<2x32xf32>
    %430 = arith.addf %428, %429 : vector<2x32xf32>
    %431 = arith.negf %430 : vector<2x32xf32>
    %432 = math.exp %431 : vector<2x32xf32>
    %cst_191 = arith.constant 1.000000e+00 : f32
    %433 = vector.broadcast %cst_191 : f32 to vector<2x32xf32>
    %434 = arith.addf %433, %432 : vector<2x32xf32>
    %435 = arith.divf %433, %434 : vector<2x32xf32>
    %436 = vector.extract_strided_slice %418 {offsets = [0, 64], sizes = [2, 32], strides = [1, 1]} : vector<2x96xf32> to vector<2x32xf32>
    %437 = vector.extract_strided_slice %419 {offsets = [0, 64], sizes = [2, 32], strides = [1, 1]} : vector<2x96xf32> to vector<2x32xf32>
    %438 = arith.addf %437, %329 : vector<2x32xf32>
    %439 = arith.mulf %427, %438 : vector<2x32xf32>
    %440 = arith.addf %436, %439 : vector<2x32xf32>
    %441 = math.tanh %440 : vector<2x32xf32>
    %cst_192 = arith.constant 1.000000e+00 : f32
    %442 = vector.broadcast %cst_192 : f32 to vector<2x32xf32>
    %443 = arith.subf %442, %435 : vector<2x32xf32>
    %444 = arith.mulf %443, %441 : vector<2x32xf32>
    %445 = arith.mulf %435, %416 : vector<2x32xf32>
    %446 = arith.addf %444, %445 : vector<2x32xf32>
    %c2_193 = arith.constant 2 : index
    %c0_194 = arith.constant 0 : index
    %c0_195 = arith.constant 0 : index
    %447 = vector.load %arg12[%c2_193, %c0_194, %c0_195] : memref<8x2x96xf32, #tpu.memory_space<vmem>>, vector<1x2x96xf32>
    %448 = vector.shape_cast %447 : vector<1x2x96xf32> to vector<2x96xf32>
    %cst_196 = arith.constant dense<0.000000e+00> : vector<2x96xf32>
    %449 = tpu.matmul %446, %323, %cst_196 {dimension_numbers = #tpu.dot_dimension_numbers<[1], [0], [0], [1], [0, 0, 1, 1], [], []>} : vector<2x32xf32>, vector<32x96xf32>, vector<2x96xf32> -> vector<2x96xf32>
    %450 = vector.extract_strided_slice %448 {offsets = [0, 0], sizes = [2, 32], strides = [1, 1]} : vector<2x96xf32> to vector<2x32xf32>
    %451 = vector.extract_strided_slice %449 {offsets = [0, 0], sizes = [2, 32], strides = [1, 1]} : vector<2x96xf32> to vector<2x32xf32>
    %452 = arith.addf %450, %451 : vector<2x32xf32>
    %453 = arith.negf %452 : vector<2x32xf32>
    %454 = math.exp %453 : vector<2x32xf32>
    %cst_197 = arith.constant 1.000000e+00 : f32
    %455 = vector.broadcast %cst_197 : f32 to vector<2x32xf32>
    %456 = arith.addf %455, %454 : vector<2x32xf32>
    %457 = arith.divf %455, %456 : vector<2x32xf32>
    %458 = vector.extract_strided_slice %448 {offsets = [0, 32], sizes = [2, 32], strides = [1, 1]} : vector<2x96xf32> to vector<2x32xf32>
    %459 = vector.extract_strided_slice %449 {offsets = [0, 32], sizes = [2, 32], strides = [1, 1]} : vector<2x96xf32> to vector<2x32xf32>
    %460 = arith.addf %458, %459 : vector<2x32xf32>
    %461 = arith.negf %460 : vector<2x32xf32>
    %462 = math.exp %461 : vector<2x32xf32>
    %cst_198 = arith.constant 1.000000e+00 : f32
    %463 = vector.broadcast %cst_198 : f32 to vector<2x32xf32>
    %464 = arith.addf %463, %462 : vector<2x32xf32>
    %465 = arith.divf %463, %464 : vector<2x32xf32>
    %466 = vector.extract_strided_slice %448 {offsets = [0, 64], sizes = [2, 32], strides = [1, 1]} : vector<2x96xf32> to vector<2x32xf32>
    %467 = vector.extract_strided_slice %449 {offsets = [0, 64], sizes = [2, 32], strides = [1, 1]} : vector<2x96xf32> to vector<2x32xf32>
    %468 = arith.addf %467, %329 : vector<2x32xf32>
    %469 = arith.mulf %457, %468 : vector<2x32xf32>
    %470 = arith.addf %466, %469 : vector<2x32xf32>
    %471 = math.tanh %470 : vector<2x32xf32>
    %cst_199 = arith.constant 1.000000e+00 : f32
    %472 = vector.broadcast %cst_199 : f32 to vector<2x32xf32>
    %473 = arith.subf %472, %465 : vector<2x32xf32>
    %474 = arith.mulf %473, %471 : vector<2x32xf32>
    %475 = arith.mulf %465, %446 : vector<2x32xf32>
    %476 = arith.addf %474, %475 : vector<2x32xf32>
    %c3_200 = arith.constant 3 : index
    %c0_201 = arith.constant 0 : index
    %c0_202 = arith.constant 0 : index
    %477 = vector.load %arg12[%c3_200, %c0_201, %c0_202] : memref<8x2x96xf32, #tpu.memory_space<vmem>>, vector<1x2x96xf32>
    %478 = vector.shape_cast %477 : vector<1x2x96xf32> to vector<2x96xf32>
    %cst_203 = arith.constant dense<0.000000e+00> : vector<2x96xf32>
    %479 = tpu.matmul %476, %323, %cst_203 {dimension_numbers = #tpu.dot_dimension_numbers<[1], [0], [0], [1], [0, 0, 1, 1], [], []>} : vector<2x32xf32>, vector<32x96xf32>, vector<2x96xf32> -> vector<2x96xf32>
    %480 = vector.extract_strided_slice %478 {offsets = [0, 0], sizes = [2, 32], strides = [1, 1]} : vector<2x96xf32> to vector<2x32xf32>
    %481 = vector.extract_strided_slice %479 {offsets = [0, 0], sizes = [2, 32], strides = [1, 1]} : vector<2x96xf32> to vector<2x32xf32>
    %482 = arith.addf %480, %481 : vector<2x32xf32>
    %483 = arith.negf %482 : vector<2x32xf32>
    %484 = math.exp %483 : vector<2x32xf32>
    %cst_204 = arith.constant 1.000000e+00 : f32
    %485 = vector.broadcast %cst_204 : f32 to vector<2x32xf32>
    %486 = arith.addf %485, %484 : vector<2x32xf32>
    %487 = arith.divf %485, %486 : vector<2x32xf32>
    %488 = vector.extract_strided_slice %478 {offsets = [0, 32], sizes = [2, 32], strides = [1, 1]} : vector<2x96xf32> to vector<2x32xf32>
    %489 = vector.extract_strided_slice %479 {offsets = [0, 32], sizes = [2, 32], strides = [1, 1]} : vector<2x96xf32> to vector<2x32xf32>
    %490 = arith.addf %488, %489 : vector<2x32xf32>
    %491 = arith.negf %490 : vector<2x32xf32>
    %492 = math.exp %491 : vector<2x32xf32>
    %cst_205 = arith.constant 1.000000e+00 : f32
    %493 = vector.broadcast %cst_205 : f32 to vector<2x32xf32>
    %494 = arith.addf %493, %492 : vector<2x32xf32>
    %495 = arith.divf %493, %494 : vector<2x32xf32>
    %496 = vector.extract_strided_slice %478 {offsets = [0, 64], sizes = [2, 32], strides = [1, 1]} : vector<2x96xf32> to vector<2x32xf32>
    %497 = vector.extract_strided_slice %479 {offsets = [0, 64], sizes = [2, 32], strides = [1, 1]} : vector<2x96xf32> to vector<2x32xf32>
    %498 = arith.addf %497, %329 : vector<2x32xf32>
    %499 = arith.mulf %487, %498 : vector<2x32xf32>
    %500 = arith.addf %496, %499 : vector<2x32xf32>
    %501 = math.tanh %500 : vector<2x32xf32>
    %cst_206 = arith.constant 1.000000e+00 : f32
    %502 = vector.broadcast %cst_206 : f32 to vector<2x32xf32>
    %503 = arith.subf %502, %495 : vector<2x32xf32>
    %504 = arith.mulf %503, %501 : vector<2x32xf32>
    %505 = arith.mulf %495, %476 : vector<2x32xf32>
    %506 = arith.addf %504, %505 : vector<2x32xf32>
    %c4_207 = arith.constant 4 : index
    %c0_208 = arith.constant 0 : index
    %c0_209 = arith.constant 0 : index
    %507 = vector.load %arg12[%c4_207, %c0_208, %c0_209] : memref<8x2x96xf32, #tpu.memory_space<vmem>>, vector<1x2x96xf32>
    %508 = vector.shape_cast %507 : vector<1x2x96xf32> to vector<2x96xf32>
    %cst_210 = arith.constant dense<0.000000e+00> : vector<2x96xf32>
    %509 = tpu.matmul %506, %323, %cst_210 {dimension_numbers = #tpu.dot_dimension_numbers<[1], [0], [0], [1], [0, 0, 1, 1], [], []>} : vector<2x32xf32>, vector<32x96xf32>, vector<2x96xf32> -> vector<2x96xf32>
    %510 = vector.extract_strided_slice %508 {offsets = [0, 0], sizes = [2, 32], strides = [1, 1]} : vector<2x96xf32> to vector<2x32xf32>
    %511 = vector.extract_strided_slice %509 {offsets = [0, 0], sizes = [2, 32], strides = [1, 1]} : vector<2x96xf32> to vector<2x32xf32>
    %512 = arith.addf %510, %511 : vector<2x32xf32>
    %513 = arith.negf %512 : vector<2x32xf32>
    %514 = math.exp %513 : vector<2x32xf32>
    %cst_211 = arith.constant 1.000000e+00 : f32
    %515 = vector.broadcast %cst_211 : f32 to vector<2x32xf32>
    %516 = arith.addf %515, %514 : vector<2x32xf32>
    %517 = arith.divf %515, %516 : vector<2x32xf32>
    %518 = vector.extract_strided_slice %508 {offsets = [0, 32], sizes = [2, 32], strides = [1, 1]} : vector<2x96xf32> to vector<2x32xf32>
    %519 = vector.extract_strided_slice %509 {offsets = [0, 32], sizes = [2, 32], strides = [1, 1]} : vector<2x96xf32> to vector<2x32xf32>
    %520 = arith.addf %518, %519 : vector<2x32xf32>
    %521 = arith.negf %520 : vector<2x32xf32>
    %522 = math.exp %521 : vector<2x32xf32>
    %cst_212 = arith.constant 1.000000e+00 : f32
    %523 = vector.broadcast %cst_212 : f32 to vector<2x32xf32>
    %524 = arith.addf %523, %522 : vector<2x32xf32>
    %525 = arith.divf %523, %524 : vector<2x32xf32>
    %526 = vector.extract_strided_slice %508 {offsets = [0, 64], sizes = [2, 32], strides = [1, 1]} : vector<2x96xf32> to vector<2x32xf32>
    %527 = vector.extract_strided_slice %509 {offsets = [0, 64], sizes = [2, 32], strides = [1, 1]} : vector<2x96xf32> to vector<2x32xf32>
    %528 = arith.addf %527, %329 : vector<2x32xf32>
    %529 = arith.mulf %517, %528 : vector<2x32xf32>
    %530 = arith.addf %526, %529 : vector<2x32xf32>
    %531 = math.tanh %530 : vector<2x32xf32>
    %cst_213 = arith.constant 1.000000e+00 : f32
    %532 = vector.broadcast %cst_213 : f32 to vector<2x32xf32>
    %533 = arith.subf %532, %525 : vector<2x32xf32>
    %534 = arith.mulf %533, %531 : vector<2x32xf32>
    %535 = arith.mulf %525, %506 : vector<2x32xf32>
    %536 = arith.addf %534, %535 : vector<2x32xf32>
    %c5_214 = arith.constant 5 : index
    %c0_215 = arith.constant 0 : index
    %c0_216 = arith.constant 0 : index
    %537 = vector.load %arg12[%c5_214, %c0_215, %c0_216] : memref<8x2x96xf32, #tpu.memory_space<vmem>>, vector<1x2x96xf32>
    %538 = vector.shape_cast %537 : vector<1x2x96xf32> to vector<2x96xf32>
    %cst_217 = arith.constant dense<0.000000e+00> : vector<2x96xf32>
    %539 = tpu.matmul %536, %323, %cst_217 {dimension_numbers = #tpu.dot_dimension_numbers<[1], [0], [0], [1], [0, 0, 1, 1], [], []>} : vector<2x32xf32>, vector<32x96xf32>, vector<2x96xf32> -> vector<2x96xf32>
    %540 = vector.extract_strided_slice %538 {offsets = [0, 0], sizes = [2, 32], strides = [1, 1]} : vector<2x96xf32> to vector<2x32xf32>
    %541 = vector.extract_strided_slice %539 {offsets = [0, 0], sizes = [2, 32], strides = [1, 1]} : vector<2x96xf32> to vector<2x32xf32>
    %542 = arith.addf %540, %541 : vector<2x32xf32>
    %543 = arith.negf %542 : vector<2x32xf32>
    %544 = math.exp %543 : vector<2x32xf32>
    %cst_218 = arith.constant 1.000000e+00 : f32
    %545 = vector.broadcast %cst_218 : f32 to vector<2x32xf32>
    %546 = arith.addf %545, %544 : vector<2x32xf32>
    %547 = arith.divf %545, %546 : vector<2x32xf32>
    %548 = vector.extract_strided_slice %538 {offsets = [0, 32], sizes = [2, 32], strides = [1, 1]} : vector<2x96xf32> to vector<2x32xf32>
    %549 = vector.extract_strided_slice %539 {offsets = [0, 32], sizes = [2, 32], strides = [1, 1]} : vector<2x96xf32> to vector<2x32xf32>
    %550 = arith.addf %548, %549 : vector<2x32xf32>
    %551 = arith.negf %550 : vector<2x32xf32>
    %552 = math.exp %551 : vector<2x32xf32>
    %cst_219 = arith.constant 1.000000e+00 : f32
    %553 = vector.broadcast %cst_219 : f32 to vector<2x32xf32>
    %554 = arith.addf %553, %552 : vector<2x32xf32>
    %555 = arith.divf %553, %554 : vector<2x32xf32>
    %556 = vector.extract_strided_slice %538 {offsets = [0, 64], sizes = [2, 32], strides = [1, 1]} : vector<2x96xf32> to vector<2x32xf32>
    %557 = vector.extract_strided_slice %539 {offsets = [0, 64], sizes = [2, 32], strides = [1, 1]} : vector<2x96xf32> to vector<2x32xf32>
    %558 = arith.addf %557, %329 : vector<2x32xf32>
    %559 = arith.mulf %547, %558 : vector<2x32xf32>
    %560 = arith.addf %556, %559 : vector<2x32xf32>
    %561 = math.tanh %560 : vector<2x32xf32>
    %cst_220 = arith.constant 1.000000e+00 : f32
    %562 = vector.broadcast %cst_220 : f32 to vector<2x32xf32>
    %563 = arith.subf %562, %555 : vector<2x32xf32>
    %564 = arith.mulf %563, %561 : vector<2x32xf32>
    %565 = arith.mulf %555, %536 : vector<2x32xf32>
    %566 = arith.addf %564, %565 : vector<2x32xf32>
    %c6_221 = arith.constant 6 : index
    %c0_222 = arith.constant 0 : index
    %c0_223 = arith.constant 0 : index
    %567 = vector.load %arg12[%c6_221, %c0_222, %c0_223] : memref<8x2x96xf32, #tpu.memory_space<vmem>>, vector<1x2x96xf32>
    %568 = vector.shape_cast %567 : vector<1x2x96xf32> to vector<2x96xf32>
    %cst_224 = arith.constant dense<0.000000e+00> : vector<2x96xf32>
    %569 = tpu.matmul %566, %323, %cst_224 {dimension_numbers = #tpu.dot_dimension_numbers<[1], [0], [0], [1], [0, 0, 1, 1], [], []>} : vector<2x32xf32>, vector<32x96xf32>, vector<2x96xf32> -> vector<2x96xf32>
    %570 = vector.extract_strided_slice %568 {offsets = [0, 0], sizes = [2, 32], strides = [1, 1]} : vector<2x96xf32> to vector<2x32xf32>
    %571 = vector.extract_strided_slice %569 {offsets = [0, 0], sizes = [2, 32], strides = [1, 1]} : vector<2x96xf32> to vector<2x32xf32>
    %572 = arith.addf %570, %571 : vector<2x32xf32>
    %573 = arith.negf %572 : vector<2x32xf32>
    %574 = math.exp %573 : vector<2x32xf32>
    %cst_225 = arith.constant 1.000000e+00 : f32
    %575 = vector.broadcast %cst_225 : f32 to vector<2x32xf32>
    %576 = arith.addf %575, %574 : vector<2x32xf32>
    %577 = arith.divf %575, %576 : vector<2x32xf32>
    %578 = vector.extract_strided_slice %568 {offsets = [0, 32], sizes = [2, 32], strides = [1, 1]} : vector<2x96xf32> to vector<2x32xf32>
    %579 = vector.extract_strided_slice %569 {offsets = [0, 32], sizes = [2, 32], strides = [1, 1]} : vector<2x96xf32> to vector<2x32xf32>
    %580 = arith.addf %578, %579 : vector<2x32xf32>
    %581 = arith.negf %580 : vector<2x32xf32>
    %582 = math.exp %581 : vector<2x32xf32>
    %cst_226 = arith.constant 1.000000e+00 : f32
    %583 = vector.broadcast %cst_226 : f32 to vector<2x32xf32>
    %584 = arith.addf %583, %582 : vector<2x32xf32>
    %585 = arith.divf %583, %584 : vector<2x32xf32>
    %586 = vector.extract_strided_slice %568 {offsets = [0, 64], sizes = [2, 32], strides = [1, 1]} : vector<2x96xf32> to vector<2x32xf32>
    %587 = vector.extract_strided_slice %569 {offsets = [0, 64], sizes = [2, 32], strides = [1, 1]} : vector<2x96xf32> to vector<2x32xf32>
    %588 = arith.addf %587, %329 : vector<2x32xf32>
    %589 = arith.mulf %577, %588 : vector<2x32xf32>
    %590 = arith.addf %586, %589 : vector<2x32xf32>
    %591 = math.tanh %590 : vector<2x32xf32>
    %cst_227 = arith.constant 1.000000e+00 : f32
    %592 = vector.broadcast %cst_227 : f32 to vector<2x32xf32>
    %593 = arith.subf %592, %585 : vector<2x32xf32>
    %594 = arith.mulf %593, %591 : vector<2x32xf32>
    %595 = arith.mulf %585, %566 : vector<2x32xf32>
    %596 = arith.addf %594, %595 : vector<2x32xf32>
    %c7_228 = arith.constant 7 : index
    %c0_229 = arith.constant 0 : index
    %c0_230 = arith.constant 0 : index
    %597 = vector.load %arg12[%c7_228, %c0_229, %c0_230] : memref<8x2x96xf32, #tpu.memory_space<vmem>>, vector<1x2x96xf32>
    %598 = vector.shape_cast %597 : vector<1x2x96xf32> to vector<2x96xf32>
    %cst_231 = arith.constant dense<0.000000e+00> : vector<2x96xf32>
    %599 = tpu.matmul %596, %323, %cst_231 {dimension_numbers = #tpu.dot_dimension_numbers<[1], [0], [0], [1], [0, 0, 1, 1], [], []>} : vector<2x32xf32>, vector<32x96xf32>, vector<2x96xf32> -> vector<2x96xf32>
    %600 = vector.extract_strided_slice %598 {offsets = [0, 0], sizes = [2, 32], strides = [1, 1]} : vector<2x96xf32> to vector<2x32xf32>
    %601 = vector.extract_strided_slice %599 {offsets = [0, 0], sizes = [2, 32], strides = [1, 1]} : vector<2x96xf32> to vector<2x32xf32>
    %602 = arith.addf %600, %601 : vector<2x32xf32>
    %603 = arith.negf %602 : vector<2x32xf32>
    %604 = math.exp %603 : vector<2x32xf32>
    %cst_232 = arith.constant 1.000000e+00 : f32
    %605 = vector.broadcast %cst_232 : f32 to vector<2x32xf32>
    %606 = arith.addf %605, %604 : vector<2x32xf32>
    %607 = arith.divf %605, %606 : vector<2x32xf32>
    %608 = vector.extract_strided_slice %598 {offsets = [0, 32], sizes = [2, 32], strides = [1, 1]} : vector<2x96xf32> to vector<2x32xf32>
    %609 = vector.extract_strided_slice %599 {offsets = [0, 32], sizes = [2, 32], strides = [1, 1]} : vector<2x96xf32> to vector<2x32xf32>
    %610 = arith.addf %608, %609 : vector<2x32xf32>
    %611 = arith.negf %610 : vector<2x32xf32>
    %612 = math.exp %611 : vector<2x32xf32>
    %cst_233 = arith.constant 1.000000e+00 : f32
    %613 = vector.broadcast %cst_233 : f32 to vector<2x32xf32>
    %614 = arith.addf %613, %612 : vector<2x32xf32>
    %615 = arith.divf %613, %614 : vector<2x32xf32>
    %616 = vector.extract_strided_slice %598 {offsets = [0, 64], sizes = [2, 32], strides = [1, 1]} : vector<2x96xf32> to vector<2x32xf32>
    %617 = vector.extract_strided_slice %599 {offsets = [0, 64], sizes = [2, 32], strides = [1, 1]} : vector<2x96xf32> to vector<2x32xf32>
    %618 = arith.addf %617, %329 : vector<2x32xf32>
    %619 = arith.mulf %607, %618 : vector<2x32xf32>
    %620 = arith.addf %616, %619 : vector<2x32xf32>
    %621 = math.tanh %620 : vector<2x32xf32>
    %cst_234 = arith.constant 1.000000e+00 : f32
    %622 = vector.broadcast %cst_234 : f32 to vector<2x32xf32>
    %623 = arith.subf %622, %615 : vector<2x32xf32>
    %624 = arith.mulf %623, %621 : vector<2x32xf32>
    %625 = arith.mulf %615, %596 : vector<2x32xf32>
    %626 = arith.addf %624, %625 : vector<2x32xf32>
    %c0_235 = arith.constant 0 : index
    %c0_236 = arith.constant 0 : index
    %627 = vector.load %arg9[%c0_235, %c0_236] : memref<32x3xf32, #tpu.memory_space<vmem>>, vector<32x3xf32>
    %cst_237 = arith.constant dense<0.000000e+00> : vector<2x3xf32>
    %628 = tpu.matmul %626, %627, %cst_237 {dimension_numbers = #tpu.dot_dimension_numbers<[1], [0], [0], [1], [0, 0, 1, 1], [], []>} : vector<2x32xf32>, vector<32x3xf32>, vector<2x3xf32> -> vector<2x3xf32>
    %c0_238 = arith.constant 0 : index
    %c0_239 = arith.constant 0 : index
    %629 = vector.load %arg10[%c0_238, %c0_239] : memref<1x3xf32, #tpu.memory_space<vmem>>, vector<1x3xf32>
    %630 = vector.broadcast %629 : vector<1x3xf32> to vector<2x3xf32>
    %631 = arith.addf %628, %630 : vector<2x3xf32>
    %c0_240 = arith.constant 0 : index
    %c0_241 = arith.constant 0 : index
    %632 = vector.load %arg11[%c0_240, %c0_241] : memref<2x3xf32, #tpu.memory_space<vmem>>, vector<2x3xf32>
    tpu.vector_store %arg11[%c0_240, %c0_241], %631 {strides = array<i32>} : memref<2x3xf32, #tpu.memory_space<vmem>>, vector<2x3xf32>,
    return
  }
}

</mosaic_0001>

<llo_original>
// kernel: gru_model_forward.1
$region0: #{gru_model_forward.1}
  #allocation0 [shape = 'u32[]', space=smem, size = 0x4, offset = 0x4, fixed_abs, tag = 'smem constant byte address 0x4 - core index']
  #allocation1 [shape = 'u32[72,128]{1,0:T(1,128)}', space=vmem, size = 0x9000, scoped, tag = 'internal scratch']
  #allocation2 [shape = 'f32[8,2,96]{2,1,0:T(2,128)}', space=vmem, size = 0x2000, scoped, tag = 'scratch operand']
  #allocation3 [shape = 'f32[8,2,32]{2,1,0:T(2,128)}', space=vmem, size = 0x2000, scoped, tag = 'scratch operand']
  %s0 = inlined_call_operand.vmem [shape: f32[2,32], index: 0, kind: input, shape index: {}]
  %s1 = inlined_call_operand.vmem [shape: f32[4,96], index: 1, kind: input, shape index: {}]
  %s2 = inlined_call_operand.vmem [shape: f32[1,96], index: 2, kind: input, shape index: {}]
  %s3 = inlined_call_operand.vmem [shape: f32[32,96], index: 3, kind: input, shape index: {}]
  %s4 = inlined_call_operand.vmem [shape: f32[1,32], index: 4, kind: input, shape index: {}]
  %s5 = inlined_call_operand.vmem [shape: f32[32,96], index: 5, kind: input, shape index: {}]
  %s6 = inlined_call_operand.vmem [shape: f32[1,96], index: 6, kind: input, shape index: {}]
  %s7 = inlined_call_operand.hbm [shape: f32[32,96], index: 7, kind: input, shape index: {}]
  %s8 = inlined_call_operand.vmem [shape: f32[1,32], index: 8, kind: input, shape index: {}]
  %s9 = inlined_call_operand.vmem [shape: f32[32,3], index: 9, kind: input, shape index: {}]
  %s10 = inlined_call_operand.vmem [shape: f32[1,3], index: 10, kind: input, shape index: {}]
  %s11 = inlined_call_operand.hbm [shape: f32[2,3], index: 11, kind: output, shape index: {}]
  %s12 = sld [smem:[#allocation0]]
  $region58: #{gru_model_forward.1} parent=0
    _
  %s14 = ssub.s32 1, %s12
  %s15 = scalar_select 0, %s14, %s12
  $region1: #{gru_model_forward.1} parent=0
    #allocation4 [shape = 'u8[16384]{0}', space=vmem, size = 0x4000, scoped, tag = 'input window, operand 7, single buffered']
    #allocation5 [shape = 's32[1]{0}', space=sflag, size = 0x4, scoped, tag = 'scoped memory for gru_model_forward.1']
    #allocation6 [shape = 's32[1]{0}', space=sflag, size = 0x4, scoped, tag = 'scoped memory for gru_model_forward.1']
    #allocation7 [shape = 'u8[1024]{0}', space=vmem, size = 0x400, scoped, tag = 'output window, operand 0, single buffered']
    %16 = vsyncpa [#allocation5], 0
    %17 = vsyncpa [#allocation6], 0
    // Predicated region
    $region2: #{gru_model_forward.1} parent=1 // pred_check
      _
    $region3: #{gru_model_forward.1} parent=1 // pred_check_branch
      %19 = sbr.rel (0) target = $region5
    $region4: #{gru_model_forward.1} parent=1 // pred_region
      _
    $region5: #{gru_model_forward.1} parent=1 // pred_fallthru
      _
    // Predicated region
    $region6: #{gru_model_forward.1} parent=1 // pred_check
      _
    $region7: #{gru_model_forward.1} parent=1 // pred_check_branch
      %21 = sbr.rel (0) target = $region9
    $region8: #{gru_model_forward.1} parent=1 // pred_region
      _
    $region9: #{gru_model_forward.1} parent=1 // pred_fallthru
      _
    // Predicated region
    $region10: #{gru_model_forward.1} parent=1 // pred_check
      _
    $region11: #{gru_model_forward.1} parent=1 // pred_check_branch
      %23 = sbr.rel (0) target = $region13
    $region12: #{gru_model_forward.1} parent=1 // pred_region
      _
    $region13: #{gru_model_forward.1} parent=1 // pred_fallthru
      _
    // Predicated region
    $region14: #{gru_model_forward.1} parent=1 // pred_check
      _
    $region15: #{gru_model_forward.1} parent=1 // pred_check_branch
      %25 = sbr.rel (0) target = $region17
    $region16: #{gru_model_forward.1} parent=1 // pred_region
      _
    $region17: #{gru_model_forward.1} parent=1 // pred_fallthru
      _
    // Predicated region
    $region18: #{gru_model_forward.1} parent=1 // pred_check
      _
    $region19: #{gru_model_forward.1} parent=1 // pred_check_branch
      %27 = sbr.rel (0) target = $region21
    $region20: #{gru_model_forward.1} parent=1 // pred_region
      _
    $region21: #{gru_model_forward.1} parent=1 // pred_fallthru
      _
    // Predicated region
    $region22: #{gru_model_forward.1} parent=1 // pred_check
      _
    $region23: #{gru_model_forward.1} parent=1 // pred_check_branch
      %29 = sbr.rel (0) target = $region25
    $region24: #{gru_model_forward.1} parent=1 // pred_region
      _
    $region25: #{gru_model_forward.1} parent=1 // pred_fallthru
      _
    // Predicated region
    $region26: #{gru_model_forward.1} parent=1 // pred_check
      _
    $region27: #{gru_model_forward.1} parent=1 // pred_check_branch
      %31 = sbr.rel (0) target = $region29
    $region28: #{gru_model_forward.1} parent=1 // pred_region
      _
    $region29: #{gru_model_forward.1} parent=1 // pred_fallthru
      _
    // Predicated region
    $region30: #{gru_model_forward.1} parent=1 // pred_check
      _
    $region31: #{gru_model_forward.1} parent=1 // pred_check_branch
      %33 = sbr.rel (0) target = $region33
    $region32: #{gru_model_forward.1} parent=1 // pred_region
      %35 = vsyncadd [#allocation5], 0
      %s36 = sshll.u32 %s7, 4
      %s37 = int_to_ptr.hbm [resolvable:$true] %s36
      %s38 = sshll.u32 [#allocation4], 4
      %s39 = int_to_ptr.vmem [resolvable:$true] %s38
      %44 = dma.hbm_to_vmem [thread:$0]  %s37, 512, %s39, [#allocation5], 128, 128, 8
    $region33: #{gru_model_forward.1} parent=1 // pred_fallthru
      _
    // Predicated region
    $region34: #{gru_model_forward.1} parent=1 // pred_check
      _
    $region35: #{gru_model_forward.1} parent=1 // pred_check_branch
      %46 = sbr.rel (0) target = $region37
    $region36: #{gru_model_forward.1} parent=1 // pred_region
      _
    $region37: #{gru_model_forward.1} parent=1 // pred_fallthru
      _
    // Predicated region
    $region38: #{gru_model_forward.1} parent=1 // pred_check
      _
    $region39: #{gru_model_forward.1} parent=1 // pred_check_branch
      %48 = sbr.rel (0) target = $region41
    $region40: #{gru_model_forward.1} parent=1 // pred_region
      _
    $region41: #{gru_model_forward.1} parent=1 // pred_fallthru
      _
    // Predicated region
    $region42: #{gru_model_forward.1} parent=1 // pred_check
      _
    $region43: #{gru_model_forward.1} parent=1 // pred_check_branch
      %50 = sbr.rel (0) target = $region45
    $region44: #{gru_model_forward.1} parent=1 // pred_region
      _
    $region45: #{gru_model_forward.1} parent=1 // pred_fallthru
      _
    // Predicated region
    $region46: #{gru_model_forward.1} parent=1 // pred_check
      _
    $region47: #{gru_model_forward.1} parent=1 // pred_check_branch
      %52 = sbr.rel (0) target = $region49
    $region48: #{gru_model_forward.1} parent=1 // pred_region
      %54 = dma.done [#allocation5], 512
    $region49: #{gru_model_forward.1} parent=1 // pred_fallthru
      _
    %v55 = vld [vmem:[%s0] sm:$0x3]
    %v56 = vld [vmem:[%s1] sm:$0xf]
    %v57 = vld [vmem:[%s3] sm:$0xff]
    %v58 = vld [vmem:[%s3 + $0x8] sm:$0xff]
    %v59 = vld [vmem:[%s3 + $0x10] sm:$0xff]
    %v60 = vld [vmem:[%s3 + $0x18] sm:$0xff]
    %v61 = vld [vmem:[%s2] sm:$0x1]
    %v63 = vperm.slane %v61, 0
    %v65 = vld [vmem:[%s4] sm:$0x1]
    %v67 = vperm.slane %v65, 0
    %vm68 = vcmask 31744
    %v70 = vsel %vm68, %v55, 0
    %vm72 = vcmask 1043456
    %v74 = vsel %vm72, %v56, 0
    %76 = vmatpush.msra.mxu0 0.0
    %77 = vmatpush.msra.mxu0 0.0
    %78 = vmatpush.msra.mxu0 0.0
    %79 = vmatpush.msra.mxu0 0.0
    %80 = vmatpush.msra.mxu0 0.0
    %81 = vmatpush.msra.mxu0 0.0
    %82 = vmatpush.msra.mxu0 0.0
    %83 = vmatpush.msra.mxu0 0.0
    %84 = vmatpush.msra.mxu0 0.0
    %85 = vmatpush.msra.mxu0 0.0
    %86 = vmatpush.msra.mxu0 0.0
    %87 = vmatpush.msra.mxu0 0.0
    %88 = vmatpush.msra.mxu0 0.0
    %89 = vmatpush.msra.mxu0 0.0
    %90 = vmatpush.msra.mxu0 0.0
    %91 = vmatpush.msra.mxu0 %v74
    %92 = vmatmul.f32.gmra.mxu0 %v70
    %v93 = vpop.f32.mrf.mxu0
    %v94 = vadd.f32 %v63, %v93
    %95 = vdwg.mxu0
    %vm96 = vcmask 779264
    %97 = vst.msk [vmem:[#allocation2] sm:$0x3] %vm96, %v94
    %98 = vrot.lane.b32.xlu0 %v55, 124
    %v99 = vpop.permute.xlu0 %98
    %v100 = vsel %vm68, %v99, 0
    %102 = vmatpush.msra.mxu0 0.0
    %103 = vmatpush.msra.mxu0 0.0
    %104 = vmatpush.msra.mxu0 0.0
    %105 = vmatpush.msra.mxu0 0.0
    %106 = vmatpush.msra.mxu0 0.0
    %107 = vmatpush.msra.mxu0 0.0
    %108 = vmatpush.msra.mxu0 0.0
    %109 = vmatpush.msra.mxu0 0.0
    %110 = vmatpush.msra.mxu0 0.0
    %111 = vmatpush.msra.mxu0 0.0
    %112 = vmatpush.msra.mxu0 0.0
    %113 = vmatpush.msra.mxu0 0.0
    %114 = vmatpush.msra.mxu0 0.0
    %115 = vmatpush.msra.mxu0 0.0
    %116 = vmatpush.msra.mxu0 0.0
    %117 = vmatpush.msra.mxu0 %v74
    %118 = vmatmul.f32.gmra.mxu0 %v100
    %v119 = vpop.f32.mrf.mxu0
    %v120 = vadd.f32 %v63, %v119
    %121 = vdwg.mxu0
    %s122 = scalar_lea.vmem [#allocation2], 2
    %123 = vst.msk [vmem:[%s122] sm:$0x3] %vm96, %v120
    %124 = vrot.lane.b32.xlu0 %v55, 120
    %v125 = vpop.permute.xlu0 %124
    %v126 = vsel %vm68, %v125, 0
    %128 = vmatpush.msra.mxu0 0.0
    %129 = vmatpush.msra.mxu0 0.0
    %130 = vmatpush.msra.mxu0 0.0
    %131 = vmatpush.msra.mxu0 0.0
    %132 = vmatpush.msra.mxu0 0.0
    %133 = vmatpush.msra.mxu0 0.0
    %134 = vmatpush.msra.mxu0 0.0
    %135 = vmatpush.msra.mxu0 0.0
    %136 = vmatpush.msra.mxu0 0.0
    %137 = vmatpush.msra.mxu0 0.0
    %138 = vmatpush.msra.mxu0 0.0
    %139 = vmatpush.msra.mxu0 0.0
    %140 = vmatpush.msra.mxu0 0.0
    %141 = vmatpush.msra.mxu0 0.0
    %142 = vmatpush.msra.mxu0 0.0
    %143 = vmatpush.msra.mxu0 %v74
    %144 = vmatmul.f32.gmra.mxu0 %v126
    %v145 = vpop.f32.mrf.mxu0
    %v146 = vadd.f32 %v63, %v145
    %147 = vdwg.mxu0
    %s148 = scalar_lea.vmem [#allocation2], 4
    %149 = vst.msk [vmem:[%s148] sm:$0x3] %vm96, %v146
    %150 = vrot.lane.b32.xlu0 %v55, 116
    %v151 = vpop.permute.xlu0 %150
    %v152 = vsel %vm68, %v151, 0
    %154 = vmatpush.msra.mxu0 0.0
    %155 = vmatpush.msra.mxu0 0.0
    %156 = vmatpush.msra.mxu0 0.0
    %157 = vmatpush.msra.mxu0 0.0
    %158 = vmatpush.msra.mxu0 0.0
    %159 = vmatpush.msra.mxu0 0.0
    %160 = vmatpush.msra.mxu0 0.0
    %161 = vmatpush.msra.mxu0 0.0
    %162 = vmatpush.msra.mxu0 0.0
    %163 = vmatpush.msra.mxu0 0.0
    %164 = vmatpush.msra.mxu0 0.0
    %165 = vmatpush.msra.mxu0 0.0
    %166 = vmatpush.msra.mxu0 0.0
    %167 = vmatpush.msra.mxu0 0.0
    %168 = vmatpush.msra.mxu0 0.0
    %169 = vmatpush.msra.mxu0 %v74
    %170 = vmatmul.f32.gmra.mxu0 %v152
    %v171 = vpop.f32.mrf.mxu0
    %v172 = vadd.f32 %v63, %v171
    %173 = vdwg.mxu0
    %s174 = scalar_lea.vmem [#allocation2], 6
    %175 = vst.msk [vmem:[%s174] sm:$0x3] %vm96, %v172
    %176 = vrot.lane.b32.xlu0 %v55, 112
    %v177 = vpop.permute.xlu0 %176
    %v178 = vsel %vm68, %v177, 0
    %180 = vmatpush.msra.mxu0 0.0
    %181 = vmatpush.msra.mxu0 0.0
    %182 = vmatpush.msra.mxu0 0.0
    %183 = vmatpush.msra.mxu0 0.0
    %184 = vmatpush.msra.mxu0 0.0
    %185 = vmatpush.msra.mxu0 0.0
    %186 = vmatpush.msra.mxu0 0.0
    %187 = vmatpush.msra.mxu0 0.0
    %188 = vmatpush.msra.mxu0 0.0
    %189 = vmatpush.msra.mxu0 0.0
    %190 = vmatpush.msra.mxu0 0.0
    %191 = vmatpush.msra.mxu0 0.0
    %192 = vmatpush.msra.mxu0 0.0
    %193 = vmatpush.msra.mxu0 0.0
    %194 = vmatpush.msra.mxu0 0.0
    %195 = vmatpush.msra.mxu0 %v74
    %196 = vmatmul.f32.gmra.mxu0 %v178
    %v197 = vpop.f32.mrf.mxu0
    %v198 = vadd.f32 %v63, %v197
    %199 = vdwg.mxu0
    %s200 = scalar_lea.vmem [#allocation2], 8
    %201 = vst.msk [vmem:[%s200] sm:$0x3] %vm96, %v198
    %202 = vrot.lane.b32.xlu0 %v55, 108
    %v203 = vpop.permute.xlu0 %202
    %v204 = vsel %vm68, %v203, 0
    %206 = vmatpush.msra.mxu0 0.0
    %207 = vmatpush.msra.mxu0 0.0
    %208 = vmatpush.msra.mxu0 0.0
    %209 = vmatpush.msra.mxu0 0.0
    %210 = vmatpush.msra.mxu0 0.0
    %211 = vmatpush.msra.mxu0 0.0
    %212 = vmatpush.msra.mxu0 0.0
    %213 = vmatpush.msra.mxu0 0.0
    %214 = vmatpush.msra.mxu0 0.0
    %215 = vmatpush.msra.mxu0 0.0
    %216 = vmatpush.msra.mxu0 0.0
    %217 = vmatpush.msra.mxu0 0.0
    %218 = vmatpush.msra.mxu0 0.0
    %219 = vmatpush.msra.mxu0 0.0
    %220 = vmatpush.msra.mxu0 0.0
    %221 = vmatpush.msra.mxu0 %v74
    %222 = vmatmul.f32.gmra.mxu0 %v204
    %v223 = vpop.f32.mrf.mxu0
    %v224 = vadd.f32 %v63, %v223
    %225 = vdwg.mxu0
    %s226 = scalar_lea.vmem [#allocation2], 10
    %227 = vst.msk [vmem:[%s226] sm:$0x3] %vm96, %v224
    %228 = vrot.lane.b32.xlu0 %v55, 104
    %v229 = vpop.permute.xlu0 %228
    %v230 = vsel %vm68, %v229, 0
    %232 = vmatpush.msra.mxu0 0.0
    %233 = vmatpush.msra.mxu0 0.0
    %234 = vmatpush.msra.mxu0 0.0
    %235 = vmatpush.msra.mxu0 0.0
    %236 = vmatpush.msra.mxu0 0.0
    %237 = vmatpush.msra.mxu0 0.0
    %238 = vmatpush.msra.mxu0 0.0
    %239 = vmatpush.msra.mxu0 0.0
    %240 = vmatpush.msra.mxu0 0.0
    %241 = vmatpush.msra.mxu0 0.0
    %242 = vmatpush.msra.mxu0 0.0
    %243 = vmatpush.msra.mxu0 0.0
    %244 = vmatpush.msra.mxu0 0.0
    %245 = vmatpush.msra.mxu0 0.0
    %246 = vmatpush.msra.mxu0 0.0
    %247 = vmatpush.msra.mxu0 %v74
    %248 = vmatmul.f32.gmra.mxu0 %v230
    %v249 = vpop.f32.mrf.mxu0
    %v250 = vadd.f32 %v63, %v249
    %251 = vdwg.mxu0
    %s252 = scalar_lea.vmem [#allocation2], 12
    %253 = vst.msk [vmem:[%s252] sm:$0x3] %vm96, %v250
    %254 = vrot.lane.b32.xlu0 %v55, 100
    %v255 = vpop.permute.xlu0 %254
    %v256 = vsel %vm68, %v255, 0
    %258 = vmatpush.msra.mxu0 0.0
    %259 = vmatpush.msra.mxu0 0.0
    %260 = vmatpush.msra.mxu0 0.0
    %261 = vmatpush.msra.mxu0 0.0
    %262 = vmatpush.msra.mxu0 0.0
    %263 = vmatpush.msra.mxu0 0.0
    %264 = vmatpush.msra.mxu0 0.0
    %265 = vmatpush.msra.mxu0 0.0
    %266 = vmatpush.msra.mxu0 0.0
    %267 = vmatpush.msra.mxu0 0.0
    %268 = vmatpush.msra.mxu0 0.0
    %269 = vmatpush.msra.mxu0 0.0
    %270 = vmatpush.msra.mxu0 0.0
    %271 = vmatpush.msra.mxu0 0.0
    %272 = vmatpush.msra.mxu0 0.0
    %273 = vmatpush.msra.mxu0 %v74
    %274 = vmatmul.f32.gmra.mxu0 %v256
    %v275 = vpop.f32.mrf.mxu0
    %v276 = vadd.f32 %v63, %v275
    %277 = vdwg.mxu0
    %s278 = scalar_lea.vmem [#allocation2], 14
    %279 = vst.msk [vmem:[%s278] sm:$0x3] %vm96, %v276
    %v280 = vld [vmem:[#allocation2] sm:$0x3]
    %vm281 = vcmask 261120
    %v283 = vsel %vm281, 0.0, 0
    %285 = vmatpush.msra.mxu0 0.0
    %286 = vmatpush.msra.mxu0 0.0
    %287 = vmatpush.msra.mxu0 0.0
    %288 = vmatpush.msra.mxu0 0.0
    %289 = vmatpush.msra.mxu0 0.0
    %290 = vmatpush.msra.mxu0 0.0
    %291 = vmatpush.msra.mxu0 0.0
    %292 = vmatpush.msra.mxu0 0.0
    %293 = vmatpush.msra.mxu0 0.0
    %294 = vmatpush.msra.mxu0 0.0
    %295 = vmatpush.msra.mxu0 0.0
    %296 = vmatpush.msra.mxu0 0.0
    %297 = vmatpush.msra.mxu0 %v60
    %298 = vmatpush.msra.mxu0 %v59
    %299 = vmatpush.msra.mxu0 %v58
    %300 = vmatpush.msra.mxu0 %v57
    %301 = vmatmul.f32.gmra.mxu0 %v283
    %v302 = vpop.f32.mrf.mxu0
    %v303 = vadd.f32 0.0, %v302
    %304 = vdwg.mxu0
    %v305 = vadd.f32 %v280, %v303
    %v306 = vxor.u32 %v305, 2147483648
    %v307 = vmul.f32 %v306, 1.442695
    %v308 = vpow.pop %v307
    %v309 = vadd.f32 %v308, 1.0
    %v310 = vrcp.pop %v309
    %v311 = vmul.f32 %v309, %v310
    %v312 = vsub.f32 1.0, %v311
    %v313 = vmul.f32 %v310, %v312
    %v314 = vadd.f32 %v310, %v313
    %vm315 = vweird.f32 %v309
    %vm316 = vweird.f32 %v310
    %vm317 = vmor %vm315, %vm316
    %v318 = vsel %vm317, %v310, %v314
    %v319 = vand.u32 2147483647, %v309
    %vm320 = vcmp.eq.f32.partialorder %v319, 8.507059e+37
    %v321 = vand.u32 %v309, 2147483648
    %v322 = vor.u32 1.1754944e-38, %v321
    %v323 = vsel %vm320, %v322, %v318
    %v324 = vmul.f32 1.0, %v323
    %325 = vrot.lane.b32.xlu0 %v67, 64
    %v326 = vpop.permute.xlu0 %325
    %v328 = vadd.f32 %v303, %v326
    %330 = vrot.lane.b32.xlu0 %v328, 64
    %v331 = vpop.permute.xlu0 %330
    %v333 = vmul.f32 %v324, %v331
    %335 = vrot.lane.b32.xlu0 %v333, 64
    %v336 = vpop.permute.xlu0 %335
    %v338 = vadd.f32 %v280, %v336
    %v339 = vtanh.pop %v338
    %v340 = vsub.f32 1.0, %v324
    %342 = vrot.lane.b32.xlu0 %v339, 96
    %v343 = vpop.permute.xlu0 %342
    %v345 = vmul.f32 %v340, %v343
    %v346 = vmul.f32 %v324, 0.0
    %v347 = vadd.f32 %v345, %v346
    %349 = vrot.lane.b32.xlu0 %v347, 96
    %v350 = vpop.permute.xlu0 %349
    %vm352 = vcmask 254976
    %353 = vst.msk [vmem:[#allocation3] sm:$0x3] %vm352, %v350
    %v354 = vld [vmem:[%s122] sm:$0x3]
    %v355 = vsel %vm281, %v350, 0
    %357 = vmatpush.msra.mxu0 0.0
    %358 = vmatpush.msra.mxu0 0.0
    %359 = vmatpush.msra.mxu0 0.0
    %360 = vmatpush.msra.mxu0 0.0
    %361 = vmatpush.msra.mxu0 0.0
    %362 = vmatpush.msra.mxu0 0.0
    %363 = vmatpush.msra.mxu0 0.0
    %364 = vmatpush.msra.mxu0 0.0
    %365 = vmatpush.msra.mxu0 0.0
    %366 = vmatpush.msra.mxu0 0.0
    %367 = vmatpush.msra.mxu0 0.0
    %368 = vmatpush.msra.mxu0 0.0
    %369 = vmatpush.msra.mxu0 %v60
    %370 = vmatpush.msra.mxu0 %v59
    %371 = vmatpush.msra.mxu0 %v58
    %372 = vmatpush.msra.mxu0 %v57
    %373 = vmatmul.f32.gmra.mxu0 %v355
    %v374 = vpop.f32.mrf.mxu0
    %v375 = vadd.f32 0.0, %v374
    %376 = vdwg.mxu0
    %v377 = vadd.f32 %v354, %v375
    %v378 = vxor.u32 %v377, 2147483648
    %v379 = vmul.f32 %v378, 1.442695
    %v380 = vpow.pop %v379
    %v381 = vadd.f32 %v380, 1.0
    %v382 = vrcp.pop %v381
    %v383 = vmul.f32 %v381, %v382
    %v384 = vsub.f32 1.0, %v383
    %v385 = vmul.f32 %v382, %v384
    %v386 = vadd.f32 %v382, %v385
    %vm387 = vweird.f32 %v381
    %vm388 = vweird.f32 %v382
    %vm389 = vmor %vm387, %vm388
    %v390 = vsel %vm389, %v382, %v386
    %v391 = vand.u32 2147483647, %v381
    %vm392 = vcmp.eq.f32.partialorder %v391, 8.507059e+37
    %v393 = vand.u32 %v381, 2147483648
    %v394 = vor.u32 1.1754944e-38, %v393
    %v395 = vsel %vm392, %v394, %v390
    %v396 = vmul.f32 1.0, %v395
    %v397 = vadd.f32 %v375, %v326
    %399 = vrot.lane.b32.xlu0 %v397, 64
    %v400 = vpop.permute.xlu0 %399
    %v402 = vmul.f32 %v396, %v400
    %404 = vrot.lane.b32.xlu0 %v402, 64
    %v405 = vpop.permute.xlu0 %404
    %v407 = vadd.f32 %v354, %v405
    %v408 = vtanh.pop %v407
    %v409 = vsub.f32 1.0, %v396
    %411 = vrot.lane.b32.xlu0 %v408, 96
    %v412 = vpop.permute.xlu0 %411
    %v414 = vmul.f32 %v409, %v412
    %v415 = vmul.f32 %v396, %v347
    %v416 = vadd.f32 %v414, %v415
    %418 = vrot.lane.b32.xlu0 %v416, 96
    %v419 = vpop.permute.xlu0 %418
    %s421 = scalar_lea.vmem [#allocation3], 2
    %422 = vst.msk [vmem:[%s421] sm:$0x3] %vm352, %v419
    %v423 = vld [vmem:[%s148] sm:$0x3]
    %v424 = vsel %vm281, %v419, 0
    %426 = vmatpush.msra.mxu0 0.0
    %427 = vmatpush.msra.mxu0 0.0
    %428 = vmatpush.msra.mxu0 0.0
    %429 = vmatpush.msra.mxu0 0.0
    %430 = vmatpush.msra.mxu0 0.0
    %431 = vmatpush.msra.mxu0 0.0
    %432 = vmatpush.msra.mxu0 0.0
    %433 = vmatpush.msra.mxu0 0.0
    %434 = vmatpush.msra.mxu0 0.0
    %435 = vmatpush.msra.mxu0 0.0
    %436 = vmatpush.msra.mxu0 0.0
    %437 = vmatpush.msra.mxu0 0.0
    %438 = vmatpush.msra.mxu0 %v60
    %439 = vmatpush.msra.mxu0 %v59
    %440 = vmatpush.msra.mxu0 %v58
    %441 = vmatpush.msra.mxu0 %v57
    %442 = vmatmul.f32.gmra.mxu0 %v424
    %v443 = vpop.f32.mrf.mxu0
    %v444 = vadd.f32 0.0, %v443
    %445 = vdwg.mxu0
    %v446 = vadd.f32 %v423, %v444
    %v447 = vxor.u32 %v446, 2147483648
    %v448 = vmul.f32 %v447, 1.442695
    %v449 = vpow.pop %v448
    %v450 = vadd.f32 %v449, 1.0
    %v451 = vrcp.pop %v450
    %v452 = vmul.f32 %v450, %v451
    %v453 = vsub.f32 1.0, %v452
    %v454 = vmul.f32 %v451, %v453
    %v455 = vadd.f32 %v451, %v454
    %vm456 = vweird.f32 %v450
    %vm457 = vweird.f32 %v451
    %vm458 = vmor %vm456, %vm457
    %v459 = vsel %vm458, %v451, %v455
    %v460 = vand.u32 2147483647, %v450
    %vm461 = vcmp.eq.f32.partialorder %v460, 8.507059e+37
    %v462 = vand.u32 %v450, 2147483648
    %v463 = vor.u32 1.1754944e-38, %v462
    %v464 = vsel %vm461, %v463, %v459
    %v465 = vmul.f32 1.0, %v464
    %v466 = vadd.f32 %v444, %v326
    %468 = vrot.lane.b32.xlu0 %v466, 64
    %v469 = vpop.permute.xlu0 %468
    %v471 = vmul.f32 %v465, %v469
    %473 = vrot.lane.b32.xlu0 %v471, 64
    %v474 = vpop.permute.xlu0 %473
    %v476 = vadd.f32 %v423, %v474
    %v477 = vtanh.pop %v476
    %v478 = vsub.f32 1.0, %v465
    %480 = vrot.lane.b32.xlu0 %v477, 96
    %v481 = vpop.permute.xlu0 %480
    %v483 = vmul.f32 %v478, %v481
    %v484 = vmul.f32 %v465, %v416
    %v485 = vadd.f32 %v483, %v484
    %487 = vrot.lane.b32.xlu0 %v485, 96
    %v488 = vpop.permute.xlu0 %487
    %s490 = scalar_lea.vmem [#allocation3], 4
    %491 = vst.msk [vmem:[%s490] sm:$0x3] %vm352, %v488
    %v492 = vld [vmem:[%s174] sm:$0x3]
    %v493 = vsel %vm281, %v488, 0
    %495 = vmatpush.msra.mxu0 0.0
    %496 = vmatpush.msra.mxu0 0.0
    %497 = vmatpush.msra.mxu0 0.0
    %498 = vmatpush.msra.mxu0 0.0
    %499 = vmatpush.msra.mxu0 0.0
    %500 = vmatpush.msra.mxu0 0.0
    %501 = vmatpush.msra.mxu0 0.0
    %502 = vmatpush.msra.mxu0 0.0
    %503 = vmatpush.msra.mxu0 0.0
    %504 = vmatpush.msra.mxu0 0.0
    %505 = vmatpush.msra.mxu0 0.0
    %506 = vmatpush.msra.mxu0 0.0
    %507 = vmatpush.msra.mxu0 %v60
    %508 = vmatpush.msra.mxu0 %v59
    %509 = vmatpush.msra.mxu0 %v58
    %510 = vmatpush.msra.mxu0 %v57
    %511 = vmatmul.f32.gmra.mxu0 %v493
    %v512 = vpop.f32.mrf.mxu0
    %v513 = vadd.f32 0.0, %v512
    %514 = vdwg.mxu0
    %v515 = vadd.f32 %v492, %v513
    %v516 = vxor.u32 %v515, 2147483648
    %v517 = vmul.f32 %v516, 1.442695
    %v518 = vpow.pop %v517
    %v519 = vadd.f32 %v518, 1.0
    %v520 = vrcp.pop %v519
    %v521 = vmul.f32 %v519, %v520
    %v522 = vsub.f32 1.0, %v521
    %v523 = vmul.f32 %v520, %v522
    %v524 = vadd.f32 %v520, %v523
    %vm525 = vweird.f32 %v519
    %vm526 = vweird.f32 %v520
    %vm527 = vmor %vm525, %vm526
    %v528 = vsel %vm527, %v520, %v524
    %v529 = vand.u32 2147483647, %v519
    %vm530 = vcmp.eq.f32.partialorder %v529, 8.507059e+37
    %v531 = vand.u32 %v519, 2147483648
    %v532 = vor.u32 1.1754944e-38, %v531
    %v533 = vsel %vm530, %v532, %v528
    %v534 = vmul.f32 1.0, %v533
    %v535 = vadd.f32 %v513, %v326
    %537 = vrot.lane.b32.xlu0 %v535, 64
    %v538 = vpop.permute.xlu0 %537
    %v540 = vmul.f32 %v534, %v538
    %542 = vrot.lane.b32.xlu0 %v540, 64
    %v543 = vpop.permute.xlu0 %542
    %v545 = vadd.f32 %v492, %v543
    %v546 = vtanh.pop %v545
    %v547 = vsub.f32 1.0, %v534
    %549 = vrot.lane.b32.xlu0 %v546, 96
    %v550 = vpop.permute.xlu0 %549
    %v552 = vmul.f32 %v547, %v550
    %v553 = vmul.f32 %v534, %v485
    %v554 = vadd.f32 %v552, %v553
    %556 = vrot.lane.b32.xlu0 %v554, 96
    %v557 = vpop.permute.xlu0 %556
    %s559 = scalar_lea.vmem [#allocation3], 6
    %560 = vst.msk [vmem:[%s559] sm:$0x3] %vm352, %v557
    %v561 = vld [vmem:[%s200] sm:$0x3]
    %v562 = vsel %vm281, %v557, 0
    %564 = vmatpush.msra.mxu0 0.0
    %565 = vmatpush.msra.mxu0 0.0
    %566 = vmatpush.msra.mxu0 0.0
    %567 = vmatpush.msra.mxu0 0.0
    %568 = vmatpush.msra.mxu0 0.0
    %569 = vmatpush.msra.mxu0 0.0
    %570 = vmatpush.msra.mxu0 0.0
    %571 = vmatpush.msra.mxu0 0.0
    %572 = vmatpush.msra.mxu0 0.0
    %573 = vmatpush.msra.mxu0 0.0
    %574 = vmatpush.msra.mxu0 0.0
    %575 = vmatpush.msra.mxu0 0.0
    %576 = vmatpush.msra.mxu0 %v60
    %577 = vmatpush.msra.mxu0 %v59
    %578 = vmatpush.msra.mxu0 %v58
    %579 = vmatpush.msra.mxu0 %v57
    %580 = vmatmul.f32.gmra.mxu0 %v562
    %v581 = vpop.f32.mrf.mxu0
    %v582 = vadd.f32 0.0, %v581
    %583 = vdwg.mxu0
    %v584 = vadd.f32 %v561, %v582
    %v585 = vxor.u32 %v584, 2147483648
    %v586 = vmul.f32 %v585, 1.442695
    %v587 = vpow.pop %v586
    %v588 = vadd.f32 %v587, 1.0
    %v589 = vrcp.pop %v588
    %v590 = vmul.f32 %v588, %v589
    %v591 = vsub.f32 1.0, %v590
    %v592 = vmul.f32 %v589, %v591
    %v593 = vadd.f32 %v589, %v592
    %vm594 = vweird.f32 %v588
    %vm595 = vweird.f32 %v589
    %vm596 = vmor %vm594, %vm595
    %v597 = vsel %vm596, %v589, %v593
    %v598 = vand.u32 2147483647, %v588
    %vm599 = vcmp.eq.f32.partialorder %v598, 8.507059e+37
    %v600 = vand.u32 %v588, 2147483648
    %v601 = vor.u32 1.1754944e-38, %v600
    %v602 = vsel %vm599, %v601, %v597
    %v603 = vmul.f32 1.0, %v602
    %v604 = vadd.f32 %v582, %v326
    %606 = vrot.lane.b32.xlu0 %v604, 64
    %v607 = vpop.permute.xlu0 %606
    %v609 = vmul.f32 %v603, %v607
    %611 = vrot.lane.b32.xlu0 %v609, 64
    %v612 = vpop.permute.xlu0 %611
    %v614 = vadd.f32 %v561, %v612
    %v615 = vtanh.pop %v614
    %v616 = vsub.f32 1.0, %v603
    %618 = vrot.lane.b32.xlu0 %v615, 96
    %v619 = vpop.permute.xlu0 %618
    %v621 = vmul.f32 %v616, %v619
    %v622 = vmul.f32 %v603, %v554
    %v623 = vadd.f32 %v621, %v622
    %625 = vrot.lane.b32.xlu0 %v623, 96
    %v626 = vpop.permute.xlu0 %625
    %s628 = scalar_lea.vmem [#allocation3], 8
    %629 = vst.msk [vmem:[%s628] sm:$0x3] %vm352, %v626
    %v630 = vld [vmem:[%s226] sm:$0x3]
    %v631 = vsel %vm281, %v626, 0
    %633 = vmatpush.msra.mxu0 0.0
    %634 = vmatpush.msra.mxu0 0.0
    %635 = vmatpush.msra.mxu0 0.0
    %636 = vmatpush.msra.mxu0 0.0
    %637 = vmatpush.msra.mxu0 0.0
    %638 = vmatpush.msra.mxu0 0.0
    %639 = vmatpush.msra.mxu0 0.0
    %640 = vmatpush.msra.mxu0 0.0
    %641 = vmatpush.msra.mxu0 0.0
    %642 = vmatpush.msra.mxu0 0.0
    %643 = vmatpush.msra.mxu0 0.0
    %644 = vmatpush.msra.mxu0 0.0
    %645 = vmatpush.msra.mxu0 %v60
    %646 = vmatpush.msra.mxu0 %v59
    %647 = vmatpush.msra.mxu0 %v58
    %648 = vmatpush.msra.mxu0 %v57
    %649 = vmatmul.f32.gmra.mxu0 %v631
    %v650 = vpop.f32.mrf.mxu0
    %v651 = vadd.f32 0.0, %v650
    %652 = vdwg.mxu0
    %v653 = vadd.f32 %v630, %v651
    %v654 = vxor.u32 %v653, 2147483648
    %v655 = vmul.f32 %v654, 1.442695
    %v656 = vpow.pop %v655
    %v657 = vadd.f32 %v656, 1.0
    %v658 = vrcp.pop %v657
    %v659 = vmul.f32 %v657, %v658
    %v660 = vsub.f32 1.0, %v659
    %v661 = vmul.f32 %v658, %v660
    %v662 = vadd.f32 %v658, %v661
    %vm663 = vweird.f32 %v657
    %vm664 = vweird.f32 %v658
    %vm665 = vmor %vm663, %vm664
    %v666 = vsel %vm665, %v658, %v662
    %v667 = vand.u32 2147483647, %v657
    %vm668 = vcmp.eq.f32.partialorder %v667, 8.507059e+37
    %v669 = vand.u32 %v657, 2147483648
    %v670 = vor.u32 1.1754944e-38, %v669
    %v671 = vsel %vm668, %v670, %v666
    %v672 = vmul.f32 1.0, %v671
    %v673 = vadd.f32 %v651, %v326
    %675 = vrot.lane.b32.xlu0 %v673, 64
    %v676 = vpop.permute.xlu0 %675
    %v678 = vmul.f32 %v672, %v676
    %680 = vrot.lane.b32.xlu0 %v678, 64
    %v681 = vpop.permute.xlu0 %680
    %v683 = vadd.f32 %v630, %v681
    %v684 = vtanh.pop %v683
    %v685 = vsub.f32 1.0, %v672
    %687 = vrot.lane.b32.xlu0 %v684, 96
    %v688 = vpop.permute.xlu0 %687
    %v690 = vmul.f32 %v685, %v688
    %v691 = vmul.f32 %v672, %v623
    %v692 = vadd.f32 %v690, %v691
    %694 = vrot.lane.b32.xlu0 %v692, 96
    %v695 = vpop.permute.xlu0 %694
    %s697 = scalar_lea.vmem [#allocation3], 10
    %698 = vst.msk [vmem:[%s697] sm:$0x3] %vm352, %v695
    %v699 = vld [vmem:[%s252] sm:$0x3]
    %v700 = vsel %vm281, %v695, 0
    %702 = vmatpush.msra.mxu0 0.0
    %703 = vmatpush.msra.mxu0 0.0
    %704 = vmatpush.msra.mxu0 0.0
    %705 = vmatpush.msra.mxu0 0.0
    %706 = vmatpush.msra.mxu0 0.0
    %707 = vmatpush.msra.mxu0 0.0
    %708 = vmatpush.msra.mxu0 0.0
    %709 = vmatpush.msra.mxu0 0.0
    %710 = vmatpush.msra.mxu0 0.0
    %711 = vmatpush.msra.mxu0 0.0
    %712 = vmatpush.msra.mxu0 0.0
    %713 = vmatpush.msra.mxu0 0.0
    %714 = vmatpush.msra.mxu0 %v60
    %715 = vmatpush.msra.mxu0 %v59
    %716 = vmatpush.msra.mxu0 %v58
    %717 = vmatpush.msra.mxu0 %v57
    %718 = vmatmul.f32.gmra.mxu0 %v700
    %v719 = vpop.f32.mrf.mxu0
    %v720 = vadd.f32 0.0, %v719
    %721 = vdwg.mxu0
    %v722 = vadd.f32 %v699, %v720
    %v723 = vxor.u32 %v722, 2147483648
    %v724 = vmul.f32 %v723, 1.442695
    %v725 = vpow.pop %v724
    %v726 = vadd.f32 %v725, 1.0
    %v727 = vrcp.pop %v726
    %v728 = vmul.f32 %v726, %v727
    %v729 = vsub.f32 1.0, %v728
    %v730 = vmul.f32 %v727, %v729
    %v731 = vadd.f32 %v727, %v730
    %vm732 = vweird.f32 %v726
    %vm733 = vweird.f32 %v727
    %vm734 = vmor %vm732, %vm733
    %v735 = vsel %vm734, %v727, %v731
    %v736 = vand.u32 2147483647, %v726
    %vm737 = vcmp.eq.f32.partialorder %v736, 8.507059e+37
    %v738 = vand.u32 %v726, 2147483648
    %v739 = vor.u32 1.1754944e-38, %v738
    %v740 = vsel %vm737, %v739, %v735
    %v741 = vmul.f32 1.0, %v740
    %v742 = vadd.f32 %v720, %v326
    %744 = vrot.lane.b32.xlu0 %v742, 64
    %v745 = vpop.permute.xlu0 %744
    %v747 = vmul.f32 %v741, %v745
    %749 = vrot.lane.b32.xlu0 %v747, 64
    %v750 = vpop.permute.xlu0 %749
    %v752 = vadd.f32 %v699, %v750
    %v753 = vtanh.pop %v752
    %v754 = vsub.f32 1.0, %v741
    %756 = vrot.lane.b32.xlu0 %v753, 96
    %v757 = vpop.permute.xlu0 %756
    %v759 = vmul.f32 %v754, %v757
    %v760 = vmul.f32 %v741, %v692
    %v761 = vadd.f32 %v759, %v760
    %763 = vrot.lane.b32.xlu0 %v761, 96
    %v764 = vpop.permute.xlu0 %763
    %s766 = scalar_lea.vmem [#allocation3], 12
    %767 = vst.msk [vmem:[%s766] sm:$0x3] %vm352, %v764
    %v768 = vld [vmem:[%s278] sm:$0x3]
    %v769 = vsel %vm281, %v764, 0
    %771 = vmatpush.msra.mxu0 0.0
    %772 = vmatpush.msra.mxu0 0.0
    %773 = vmatpush.msra.mxu0 0.0
    %774 = vmatpush.msra.mxu0 0.0
    %775 = vmatpush.msra.mxu0 0.0
    %776 = vmatpush.msra.mxu0 0.0
    %777 = vmatpush.msra.mxu0 0.0
    %778 = vmatpush.msra.mxu0 0.0
    %779 = vmatpush.msra.mxu0 0.0
    %780 = vmatpush.msra.mxu0 0.0
    %781 = vmatpush.msra.mxu0 0.0
    %782 = vmatpush.msra.mxu0 0.0
    %783 = vmatpush.msra.mxu0 %v60
    %784 = vmatpush.msra.mxu0 %v59
    %785 = vmatpush.msra.mxu0 %v58
    %786 = vmatpush.msra.mxu0 %v57
    %787 = vmatmul.f32.gmra.mxu0 %v769
    %v788 = vpop.f32.mrf.mxu0
    %v789 = vadd.f32 0.0, %v788
    %790 = vdwg.mxu0
    %v791 = vadd.f32 %v768, %v789
    %v792 = vxor.u32 %v791, 2147483648
    %v793 = vmul.f32 %v792, 1.442695
    %v794 = vpow.pop %v793
    %v795 = vadd.f32 %v794, 1.0
    %v796 = vrcp.pop %v795
    %v797 = vmul.f32 %v795, %v796
    %v798 = vsub.f32 1.0, %v797
    %v799 = vmul.f32 %v796, %v798
    %v800 = vadd.f32 %v796, %v799
    %vm801 = vweird.f32 %v795
    %vm802 = vweird.f32 %v796
    %vm803 = vmor %vm801, %vm802
    %v804 = vsel %vm803, %v796, %v800
    %v805 = vand.u32 2147483647, %v795
    %vm806 = vcmp.eq.f32.partialorder %v805, 8.507059e+37
    %v807 = vand.u32 %v795, 2147483648
    %v808 = vor.u32 1.1754944e-38, %v807
    %v809 = vsel %vm806, %v808, %v804
    %v810 = vmul.f32 1.0, %v809
    %v811 = vadd.f32 %v789, %v326
    %813 = vrot.lane.b32.xlu0 %v811, 64
    %v814 = vpop.permute.xlu0 %813
    %v816 = vmul.f32 %v810, %v814
    %818 = vrot.lane.b32.xlu0 %v816, 64
    %v819 = vpop.permute.xlu0 %818
    %v821 = vadd.f32 %v768, %v819
    %v822 = vtanh.pop %v821
    %v823 = vsub.f32 1.0, %v810
    %825 = vrot.lane.b32.xlu0 %v822, 96
    %v826 = vpop.permute.xlu0 %825
    %v828 = vmul.f32 %v823, %v826
    %v829 = vmul.f32 %v810, %v761
    %v830 = vadd.f32 %v828, %v829
    %832 = vrot.lane.b32.xlu0 %v830, 96
    %v833 = vpop.permute.xlu0 %832
    %s835 = scalar_lea.vmem [#allocation3], 14
    %836 = vst.msk [vmem:[%s835] sm:$0x3] %vm352, %v833
    %v837 = vld [vmem:[%s5] sm:$0xff]
    %v838 = vld [vmem:[%s5 + $0x8] sm:$0xff]
    %v839 = vld [vmem:[%s5 + $0x10] sm:$0xff]
    %v840 = vld [vmem:[%s5 + $0x18] sm:$0xff]
    %v841 = vld [vmem:[#allocation4] sm:$0xff]
    %v842 = vld [vmem:[#allocation4 + $0x8] sm:$0xff]
    %v843 = vld [vmem:[#allocation4 + $0x10] sm:$0xff]
    %v844 = vld [vmem:[#allocation4 + $0x18] sm:$0xff]
    %v845 = vld [vmem:[%s6] sm:$0x1]
    %v847 = vperm.slane %v845, 0
    %v849 = vld [vmem:[%s8] sm:$0x1]
    %v851 = vperm.slane %v849, 0
    %v852 = vld [vmem:[#allocation3] sm:$0x3]
    %v854 = vsel %vm281, %v852, 0
    %856 = vmatpush.msra.mxu0 0.0
    %857 = vmatpush.msra.mxu0 0.0
    %858 = vmatpush.msra.mxu0 0.0
    %859 = vmatpush.msra.mxu0 0.0
    %860 = vmatpush.msra.mxu0 0.0
    %861 = vmatpush.msra.mxu0 0.0
    %862 = vmatpush.msra.mxu0 0.0
    %863 = vmatpush.msra.mxu0 0.0
    %864 = vmatpush.msra.mxu0 0.0
    %865 = vmatpush.msra.mxu0 0.0
    %866 = vmatpush.msra.mxu0 0.0
    %867 = vmatpush.msra.mxu0 0.0
    %868 = vmatpush.msra.mxu0 %v840
    %869 = vmatpush.msra.mxu0 %v839
    %870 = vmatpush.msra.mxu0 %v838
    %871 = vmatpush.msra.mxu0 %v837
    %872 = vmatmul.f32.gmra.mxu0 %v854
    %v873 = vpop.f32.mrf.mxu0
    %v874 = vadd.f32 %v847, %v873
    %875 = vdwg.mxu0
    %876 = vst.msk [vmem:[#allocation2] sm:$0x3] %vm96, %v874
    %v877 = vld [vmem:[%s421] sm:$0x3]
    %v879 = vsel %vm281, %v877, 0
    %881 = vmatpush.msra.mxu0 0.0
    %882 = vmatpush.msra.mxu0 0.0
    %883 = vmatpush.msra.mxu0 0.0
    %884 = vmatpush.msra.mxu0 0.0
    %885 = vmatpush.msra.mxu0 0.0
    %886 = vmatpush.msra.mxu0 0.0
    %887 = vmatpush.msra.mxu0 0.0
    %888 = vmatpush.msra.mxu0 0.0
    %889 = vmatpush.msra.mxu0 0.0
    %890 = vmatpush.msra.mxu0 0.0
    %891 = vmatpush.msra.mxu0 0.0
    %892 = vmatpush.msra.mxu0 0.0
    %893 = vmatpush.msra.mxu0 %v840
    %894 = vmatpush.msra.mxu0 %v839
    %895 = vmatpush.msra.mxu0 %v838
    %896 = vmatpush.msra.mxu0 %v837
    %897 = vmatmul.f32.gmra.mxu0 %v879
    %v898 = vpop.f32.mrf.mxu0
    %v899 = vadd.f32 %v847, %v898
    %900 = vdwg.mxu0
    %901 = vst.msk [vmem:[%s122] sm:$0x3] %vm96, %v899
    %v902 = vld [vmem:[%s490] sm:$0x3]
    %v904 = vsel %vm281, %v902, 0
    %906 = vmatpush.msra.mxu0 0.0
    %907 = vmatpush.msra.mxu0 0.0
    %908 = vmatpush.msra.mxu0 0.0
    %909 = vmatpush.msra.mxu0 0.0
    %910 = vmatpush.msra.mxu0 0.0
    %911 = vmatpush.msra.mxu0 0.0
    %912 = vmatpush.msra.mxu0 0.0
    %913 = vmatpush.msra.mxu0 0.0
    %914 = vmatpush.msra.mxu0 0.0
    %915 = vmatpush.msra.mxu0 0.0
    %916 = vmatpush.msra.mxu0 0.0
    %917 = vmatpush.msra.mxu0 0.0
    %918 = vmatpush.msra.mxu0 %v840
    %919 = vmatpush.msra.mxu0 %v839
    %920 = vmatpush.msra.mxu0 %v838
    %921 = vmatpush.msra.mxu0 %v837
    %922 = vmatmul.f32.gmra.mxu0 %v904
    %v923 = vpop.f32.mrf.mxu0
    %v924 = vadd.f32 %v847, %v923
    %925 = vdwg.mxu0
    %926 = vst.msk [vmem:[%s148] sm:$0x3] %vm96, %v924
    %v927 = vld [vmem:[%s559] sm:$0x3]
    %v929 = vsel %vm281, %v927, 0
    %931 = vmatpush.msra.mxu0 0.0
    %932 = vmatpush.msra.mxu0 0.0
    %933 = vmatpush.msra.mxu0 0.0
    %934 = vmatpush.msra.mxu0 0.0
    %935 = vmatpush.msra.mxu0 0.0
    %936 = vmatpush.msra.mxu0 0.0
    %937 = vmatpush.msra.mxu0 0.0
    %938 = vmatpush.msra.mxu0 0.0
    %939 = vmatpush.msra.mxu0 0.0
    %940 = vmatpush.msra.mxu0 0.0
    %941 = vmatpush.msra.mxu0 0.0
    %942 = vmatpush.msra.mxu0 0.0
    %943 = vmatpush.msra.mxu0 %v840
    %944 = vmatpush.msra.mxu0 %v839
    %945 = vmatpush.msra.mxu0 %v838
    %946 = vmatpush.msra.mxu0 %v837
    %947 = vmatmul.f32.gmra.mxu0 %v929
    %v948 = vpop.f32.mrf.mxu0
    %v949 = vadd.f32 %v847, %v948
    %950 = vdwg.mxu0
    %951 = vst.msk [vmem:[%s174] sm:$0x3] %vm96, %v949
    %v952 = vld [vmem:[%s628] sm:$0x3]
    %v954 = vsel %vm281, %v952, 0
    %956 = vmatpush.msra.mxu0 0.0
    %957 = vmatpush.msra.mxu0 0.0
    %958 = vmatpush.msra.mxu0 0.0
    %959 = vmatpush.msra.mxu0 0.0
    %960 = vmatpush.msra.mxu0 0.0
    %961 = vmatpush.msra.mxu0 0.0
    %962 = vmatpush.msra.mxu0 0.0
    %963 = vmatpush.msra.mxu0 0.0
    %964 = vmatpush.msra.mxu0 0.0
    %965 = vmatpush.msra.mxu0 0.0
    %966 = vmatpush.msra.mxu0 0.0
    %967 = vmatpush.msra.mxu0 0.0
    %968 = vmatpush.msra.mxu0 %v840
    %969 = vmatpush.msra.mxu0 %v839
    %970 = vmatpush.msra.mxu0 %v838
    %971 = vmatpush.msra.mxu0 %v837
    %972 = vmatmul.f32.gmra.mxu0 %v954
    %v973 = vpop.f32.mrf.mxu0
    %v974 = vadd.f32 %v847, %v973
    %975 = vdwg.mxu0
    %976 = vst.msk [vmem:[%s200] sm:$0x3] %vm96, %v974
    %v977 = vld [vmem:[%s697] sm:$0x3]
    %v979 = vsel %vm281, %v977, 0
    %981 = vmatpush.msra.mxu0 0.0
    %982 = vmatpush.msra.mxu0 0.0
    %983 = vmatpush.msra.mxu0 0.0
    %984 = vmatpush.msra.mxu0 0.0
    %985 = vmatpush.msra.mxu0 0.0
    %986 = vmatpush.msra.mxu0 0.0
    %987 = vmatpush.msra.mxu0 0.0
    %988 = vmatpush.msra.mxu0 0.0
    %989 = vmatpush.msra.mxu0 0.0
    %990 = vmatpush.msra.mxu0 0.0
    %991 = vmatpush.msra.mxu0 0.0
    %992 = vmatpush.msra.mxu0 0.0
    %993 = vmatpush.msra.mxu0 %v840
    %994 = vmatpush.msra.mxu0 %v839
    %995 = vmatpush.msra.mxu0 %v838
    %996 = vmatpush.msra.mxu0 %v837
    %997 = vmatmul.f32.gmra.mxu0 %v979
    %v998 = vpop.f32.mrf.mxu0
    %v999 = vadd.f32 %v847, %v998
    %1000 = vdwg.mxu0
    %1001 = vst.msk [vmem:[%s226] sm:$0x3] %vm96, %v999
    %v1002 = vld [vmem:[%s766] sm:$0x3]
    %v1004 = vsel %vm281, %v1002, 0
    %1006 = vmatpush.msra.mxu0 0.0
    %1007 = vmatpush.msra.mxu0 0.0
    %1008 = vmatpush.msra.mxu0 0.0
    %1009 = vmatpush.msra.mxu0 0.0
    %1010 = vmatpush.msra.mxu0 0.0
    %1011 = vmatpush.msra.mxu0 0.0
    %1012 = vmatpush.msra.mxu0 0.0
    %1013 = vmatpush.msra.mxu0 0.0
    %1014 = vmatpush.msra.mxu0 0.0
    %1015 = vmatpush.msra.mxu0 0.0
    %1016 = vmatpush.msra.mxu0 0.0
    %1017 = vmatpush.msra.mxu0 0.0
    %1018 = vmatpush.msra.mxu0 %v840
    %1019 = vmatpush.msra.mxu0 %v839
    %1020 = vmatpush.msra.mxu0 %v838
    %1021 = vmatpush.msra.mxu0 %v837
    %1022 = vmatmul.f32.gmra.mxu0 %v1004
    %v1023 = vpop.f32.mrf.mxu0
    %v1024 = vadd.f32 %v847, %v1023
    %1025 = vdwg.mxu0
    %1026 = vst.msk [vmem:[%s252] sm:$0x3] %vm96, %v1024
    %v1027 = vld [vmem:[%s835] sm:$0x3]
    %v1029 = vsel %vm281, %v1027, 0
    %1031 = vmatpush.msra.mxu0 0.0
    %1032 = vmatpush.msra.mxu0 0.0
    %1033 = vmatpush.msra.mxu0 0.0
    %1034 = vmatpush.msra.mxu0 0.0
    %1035 = vmatpush.msra.mxu0 0.0
    %1036 = vmatpush.msra.mxu0 0.0
    %1037 = vmatpush.msra.mxu0 0.0
    %1038 = vmatpush.msra.mxu0 0.0
    %1039 = vmatpush.msra.mxu0 0.0
    %1040 = vmatpush.msra.mxu0 0.0
    %1041 = vmatpush.msra.mxu0 0.0
    %1042 = vmatpush.msra.mxu0 0.0
    %1043 = vmatpush.msra.mxu0 %v840
    %1044 = vmatpush.msra.mxu0 %v839
    %1045 = vmatpush.msra.mxu0 %v838
    %1046 = vmatpush.msra.mxu0 %v837
    %1047 = vmatmul.f32.gmra.mxu0 %v1029
    %v1048 = vpop.f32.mrf.mxu0
    %v1049 = vadd.f32 %v847, %v1048
    %1050 = vdwg.mxu0
    %1051 = vst.msk [vmem:[%s278] sm:$0x3] %vm96, %v1049
    %v1052 = vld [vmem:[#allocation2] sm:$0x3]
    %1053 = vmatpush.msra.mxu0 0.0
    %1054 = vmatpush.msra.mxu0 0.0
    %1055 = vmatpush.msra.mxu0 0.0
    %1056 = vmatpush.msra.mxu0 0.0
    %1057 = vmatpush.msra.mxu0 0.0
    %1058 = vmatpush.msra.mxu0 0.0
    %1059 = vmatpush.msra.mxu0 0.0
    %1060 = vmatpush.msra.mxu0 0.0
    %1061 = vmatpush.msra.mxu0 0.0
    %1062 = vmatpush.msra.mxu0 0.0
    %1063 = vmatpush.msra.mxu0 0.0
    %1064 = vmatpush.msra.mxu0 0.0
    %1065 = vmatpush.msra.mxu0 %v844
    %1066 = vmatpush.msra.mxu0 %v843
    %1067 = vmatpush.msra.mxu0 %v842
    %1068 = vmatpush.msra.mxu0 %v841
    %1069 = vmatmul.f32.gmra.mxu0 %v283
    %v1070 = vpop.f32.mrf.mxu0
    %v1071 = vadd.f32 0.0, %v1070
    %1072 = vdwg.mxu0
    %v1073 = vadd.f32 %v1052, %v1071
    %v1074 = vxor.u32 %v1073, 2147483648
    %v1075 = vmul.f32 %v1074, 1.442695
    %v1076 = vpow.pop %v1075
    %v1077 = vadd.f32 %v1076, 1.0
    %v1078 = vrcp.pop %v1077
    %v1079 = vmul.f32 %v1077, %v1078
    %v1080 = vsub.f32 1.0, %v1079
    %v1081 = vmul.f32 %v1078, %v1080
    %v1082 = vadd.f32 %v1078, %v1081
    %vm1083 = vweird.f32 %v1077
    %vm1084 = vweird.f32 %v1078
    %vm1085 = vmor %vm1083, %vm1084
    %v1086 = vsel %vm1085, %v1078, %v1082
    %v1087 = vand.u32 2147483647, %v1077
    %vm1088 = vcmp.eq.f32.partialorder %v1087, 8.507059e+37
    %v1089 = vand.u32 %v1077, 2147483648
    %v1090 = vor.u32 1.1754944e-38, %v1089
    %v1091 = vsel %vm1088, %v1090, %v1086
    %v1092 = vmul.f32 1.0, %v1091
    %1093 = vrot.lane.b32.xlu0 %v851, 64
    %v1094 = vpop.permute.xlu0 %1093
    %v1096 = vadd.f32 %v1071, %v1094
    %1098 = vrot.lane.b32.xlu0 %v1096, 64
    %v1099 = vpop.permute.xlu0 %1098
    %v1101 = vmul.f32 %v1092, %v1099
    %1103 = vrot.lane.b32.xlu0 %v1101, 64
    %v1104 = vpop.permute.xlu0 %1103
    %v1106 = vadd.f32 %v1052, %v1104
    %v1107 = vtanh.pop %v1106
    %v1108 = vsub.f32 1.0, %v1092
    %1110 = vrot.lane.b32.xlu0 %v1107, 96
    %v1111 = vpop.permute.xlu0 %1110
    %v1113 = vmul.f32 %v1108, %v1111
    %v1114 = vmul.f32 %v1092, 0.0
    %v1115 = vadd.f32 %v1113, %v1114
    %v1116 = vld [vmem:[%s122] sm:$0x3]
    %1118 = vrot.lane.b32.xlu0 %v1115, 96
    %v1119 = vpop.permute.xlu0 %1118
    %v1120 = vsel %vm281, %v1119, 0
    %1122 = vmatpush.msra.mxu0 0.0
    %1123 = vmatpush.msra.mxu0 0.0
    %1124 = vmatpush.msra.mxu0 0.0
    %1125 = vmatpush.msra.mxu0 0.0
    %1126 = vmatpush.msra.mxu0 0.0
    %1127 = vmatpush.msra.mxu0 0.0
    %1128 = vmatpush.msra.mxu0 0.0
    %1129 = vmatpush.msra.mxu0 0.0
    %1130 = vmatpush.msra.mxu0 0.0
    %1131 = vmatpush.msra.mxu0 0.0
    %1132 = vmatpush.msra.mxu0 0.0
    %1133 = vmatpush.msra.mxu0 0.0
    %1134 = vmatpush.msra.mxu0 %v844
    %1135 = vmatpush.msra.mxu0 %v843
    %1136 = vmatpush.msra.mxu0 %v842
    %1137 = vmatpush.msra.mxu0 %v841
    %1138 = vmatmul.f32.gmra.mxu0 %v1120
    %v1139 = vpop.f32.mrf.mxu0
    %v1140 = vadd.f32 0.0, %v1139
    %1141 = vdwg.mxu0
    %v1142 = vadd.f32 %v1116, %v1140
    %v1143 = vxor.u32 %v1142, 2147483648
    %v1144 = vmul.f32 %v1143, 1.442695
    %v1145 = vpow.pop %v1144
    %v1146 = vadd.f32 %v1145, 1.0
    %v1147 = vrcp.pop %v1146
    %v1148 = vmul.f32 %v1146, %v1147
    %v1149 = vsub.f32 1.0, %v1148
    %v1150 = vmul.f32 %v1147, %v1149
    %v1151 = vadd.f32 %v1147, %v1150
    %vm1152 = vweird.f32 %v1146
    %vm1153 = vweird.f32 %v1147
    %vm1154 = vmor %vm1152, %vm1153
    %v1155 = vsel %vm1154, %v1147, %v1151
    %v1156 = vand.u32 2147483647, %v1146
    %vm1157 = vcmp.eq.f32.partialorder %v1156, 8.507059e+37
    %v1158 = vand.u32 %v1146, 2147483648
    %v1159 = vor.u32 1.1754944e-38, %v1158
    %v1160 = vsel %vm1157, %v1159, %v1155
    %v1161 = vmul.f32 1.0, %v1160
    %v1162 = vadd.f32 %v1140, %v1094
    %1164 = vrot.lane.b32.xlu0 %v1162, 64
    %v1165 = vpop.permute.xlu0 %1164
    %v1167 = vmul.f32 %v1161, %v1165
    %1169 = vrot.lane.b32.xlu0 %v1167, 64
    %v1170 = vpop.permute.xlu0 %1169
    %v1172 = vadd.f32 %v1116, %v1170
    %v1173 = vtanh.pop %v1172
    %v1174 = vsub.f32 1.0, %v1161
    %1176 = vrot.lane.b32.xlu0 %v1173, 96
    %v1177 = vpop.permute.xlu0 %1176
    %v1179 = vmul.f32 %v1174, %v1177
    %v1180 = vmul.f32 %v1161, %v1115
    %v1181 = vadd.f32 %v1179, %v1180
    %v1182 = vld [vmem:[%s148] sm:$0x3]
    %1184 = vrot.lane.b32.xlu0 %v1181, 96
    %v1185 = vpop.permute.xlu0 %1184
    %v1186 = vsel %vm281, %v1185, 0
    %1188 = vmatpush.msra.mxu0 0.0
    %1189 = vmatpush.msra.mxu0 0.0
    %1190 = vmatpush.msra.mxu0 0.0
    %1191 = vmatpush.msra.mxu0 0.0
    %1192 = vmatpush.msra.mxu0 0.0
    %1193 = vmatpush.msra.mxu0 0.0
    %1194 = vmatpush.msra.mxu0 0.0
    %1195 = vmatpush.msra.mxu0 0.0
    %1196 = vmatpush.msra.mxu0 0.0
    %1197 = vmatpush.msra.mxu0 0.0
    %1198 = vmatpush.msra.mxu0 0.0
    %1199 = vmatpush.msra.mxu0 0.0
    %1200 = vmatpush.msra.mxu0 %v844
    %1201 = vmatpush.msra.mxu0 %v843
    %1202 = vmatpush.msra.mxu0 %v842
    %1203 = vmatpush.msra.mxu0 %v841
    %1204 = vmatmul.f32.gmra.mxu0 %v1186
    %v1205 = vpop.f32.mrf.mxu0
    %v1206 = vadd.f32 0.0, %v1205
    %1207 = vdwg.mxu0
    %v1208 = vadd.f32 %v1182, %v1206
    %v1209 = vxor.u32 %v1208, 2147483648
    %v1210 = vmul.f32 %v1209, 1.442695
    %v1211 = vpow.pop %v1210
    %v1212 = vadd.f32 %v1211, 1.0
    %v1213 = vrcp.pop %v1212
    %v1214 = vmul.f32 %v1212, %v1213
    %v1215 = vsub.f32 1.0, %v1214
    %v1216 = vmul.f32 %v1213, %v1215
    %v1217 = vadd.f32 %v1213, %v1216
    %vm1218 = vweird.f32 %v1212
    %vm1219 = vweird.f32 %v1213
    %vm1220 = vmor %vm1218, %vm1219
    %v1221 = vsel %vm1220, %v1213, %v1217
    %v1222 = vand.u32 2147483647, %v1212
    %vm1223 = vcmp.eq.f32.partialorder %v1222, 8.507059e+37
    %v1224 = vand.u32 %v1212, 2147483648
    %v1225 = vor.u32 1.1754944e-38, %v1224
    %v1226 = vsel %vm1223, %v1225, %v1221
    %v1227 = vmul.f32 1.0, %v1226
    %v1228 = vadd.f32 %v1206, %v1094
    %1230 = vrot.lane.b32.xlu0 %v1228, 64
    %v1231 = vpop.permute.xlu0 %1230
    %v1233 = vmul.f32 %v1227, %v1231
    %1235 = vrot.lane.b32.xlu0 %v1233, 64
    %v1236 = vpop.permute.xlu0 %1235
    %v1238 = vadd.f32 %v1182, %v1236
    %v1239 = vtanh.pop %v1238
    %v1240 = vsub.f32 1.0, %v1227
    %1242 = vrot.lane.b32.xlu0 %v1239, 96
    %v1243 = vpop.permute.xlu0 %1242
    %v1245 = vmul.f32 %v1240, %v1243
    %v1246 = vmul.f32 %v1227, %v1181
    %v1247 = vadd.f32 %v1245, %v1246
    %v1248 = vld [vmem:[%s174] sm:$0x3]
    %1250 = vrot.lane.b32.xlu0 %v1247, 96
    %v1251 = vpop.permute.xlu0 %1250
    %v1252 = vsel %vm281, %v1251, 0
    %1254 = vmatpush.msra.mxu0 0.0
    %1255 = vmatpush.msra.mxu0 0.0
    %1256 = vmatpush.msra.mxu0 0.0
    %1257 = vmatpush.msra.mxu0 0.0
    %1258 = vmatpush.msra.mxu0 0.0
    %1259 = vmatpush.msra.mxu0 0.0
    %1260 = vmatpush.msra.mxu0 0.0
    %1261 = vmatpush.msra.mxu0 0.0
    %1262 = vmatpush.msra.mxu0 0.0
    %1263 = vmatpush.msra.mxu0 0.0
    %1264 = vmatpush.msra.mxu0 0.0
    %1265 = vmatpush.msra.mxu0 0.0
    %1266 = vmatpush.msra.mxu0 %v844
    %1267 = vmatpush.msra.mxu0 %v843
    %1268 = vmatpush.msra.mxu0 %v842
    %1269 = vmatpush.msra.mxu0 %v841
    %1270 = vmatmul.f32.gmra.mxu0 %v1252
    %v1271 = vpop.f32.mrf.mxu0
    %v1272 = vadd.f32 0.0, %v1271
    %1273 = vdwg.mxu0
    %v1274 = vadd.f32 %v1248, %v1272
    %v1275 = vxor.u32 %v1274, 2147483648
    %v1276 = vmul.f32 %v1275, 1.442695
    %v1277 = vpow.pop %v1276
    %v1278 = vadd.f32 %v1277, 1.0
    %v1279 = vrcp.pop %v1278
    %v1280 = vmul.f32 %v1278, %v1279
    %v1281 = vsub.f32 1.0, %v1280
    %v1282 = vmul.f32 %v1279, %v1281
    %v1283 = vadd.f32 %v1279, %v1282
    %vm1284 = vweird.f32 %v1278
    %vm1285 = vweird.f32 %v1279
    %vm1286 = vmor %vm1284, %vm1285
    %v1287 = vsel %vm1286, %v1279, %v1283
    %v1288 = vand.u32 2147483647, %v1278
    %vm1289 = vcmp.eq.f32.partialorder %v1288, 8.507059e+37
    %v1290 = vand.u32 %v1278, 2147483648
    %v1291 = vor.u32 1.1754944e-38, %v1290
    %v1292 = vsel %vm1289, %v1291, %v1287
    %v1293 = vmul.f32 1.0, %v1292
    %v1294 = vadd.f32 %v1272, %v1094
    %1296 = vrot.lane.b32.xlu0 %v1294, 64
    %v1297 = vpop.permute.xlu0 %1296
    %v1299 = vmul.f32 %v1293, %v1297
    %1301 = vrot.lane.b32.xlu0 %v1299, 64
    %v1302 = vpop.permute.xlu0 %1301
    %v1304 = vadd.f32 %v1248, %v1302
    %v1305 = vtanh.pop %v1304
    %v1306 = vsub.f32 1.0, %v1293
    %1308 = vrot.lane.b32.xlu0 %v1305, 96
    %v1309 = vpop.permute.xlu0 %1308
    %v1311 = vmul.f32 %v1306, %v1309
    %v1312 = vmul.f32 %v1293, %v1247
    %v1313 = vadd.f32 %v1311, %v1312
    %v1314 = vld [vmem:[%s200] sm:$0x3]
    %1316 = vrot.lane.b32.xlu0 %v1313, 96
    %v1317 = vpop.permute.xlu0 %1316
    %v1318 = vsel %vm281, %v1317, 0
    %1320 = vmatpush.msra.mxu0 0.0
    %1321 = vmatpush.msra.mxu0 0.0
    %1322 = vmatpush.msra.mxu0 0.0
    %1323 = vmatpush.msra.mxu0 0.0
    %1324 = vmatpush.msra.mxu0 0.0
    %1325 = vmatpush.msra.mxu0 0.0
    %1326 = vmatpush.msra.mxu0 0.0
    %1327 = vmatpush.msra.mxu0 0.0
    %1328 = vmatpush.msra.mxu0 0.0
    %1329 = vmatpush.msra.mxu0 0.0
    %1330 = vmatpush.msra.mxu0 0.0
    %1331 = vmatpush.msra.mxu0 0.0
    %1332 = vmatpush.msra.mxu0 %v844
    %1333 = vmatpush.msra.mxu0 %v843
    %1334 = vmatpush.msra.mxu0 %v842
    %1335 = vmatpush.msra.mxu0 %v841
    %1336 = vmatmul.f32.gmra.mxu0 %v1318
    %v1337 = vpop.f32.mrf.mxu0
    %v1338 = vadd.f32 0.0, %v1337
    %1339 = vdwg.mxu0
    %v1340 = vadd.f32 %v1314, %v1338
    %v1341 = vxor.u32 %v1340, 2147483648
    %v1342 = vmul.f32 %v1341, 1.442695
    %v1343 = vpow.pop %v1342
    %v1344 = vadd.f32 %v1343, 1.0
    %v1345 = vrcp.pop %v1344
    %v1346 = vmul.f32 %v1344, %v1345
    %v1347 = vsub.f32 1.0, %v1346
    %v1348 = vmul.f32 %v1345, %v1347
    %v1349 = vadd.f32 %v1345, %v1348
    %vm1350 = vweird.f32 %v1344
    %vm1351 = vweird.f32 %v1345
    %vm1352 = vmor %vm1350, %vm1351
    %v1353 = vsel %vm1352, %v1345, %v1349
    %v1354 = vand.u32 2147483647, %v1344
    %vm1355 = vcmp.eq.f32.partialorder %v1354, 8.507059e+37
    %v1356 = vand.u32 %v1344, 2147483648
    %v1357 = vor.u32 1.1754944e-38, %v1356
    %v1358 = vsel %vm1355, %v1357, %v1353
    %v1359 = vmul.f32 1.0, %v1358
    %v1360 = vadd.f32 %v1338, %v1094
    %1362 = vrot.lane.b32.xlu0 %v1360, 64
    %v1363 = vpop.permute.xlu0 %1362
    %v1365 = vmul.f32 %v1359, %v1363
    %1367 = vrot.lane.b32.xlu0 %v1365, 64
    %v1368 = vpop.permute.xlu0 %1367
    %v1370 = vadd.f32 %v1314, %v1368
    %v1371 = vtanh.pop %v1370
    %v1372 = vsub.f32 1.0, %v1359
    %1374 = vrot.lane.b32.xlu0 %v1371, 96
    %v1375 = vpop.permute.xlu0 %1374
    %v1377 = vmul.f32 %v1372, %v1375
    %v1378 = vmul.f32 %v1359, %v1313
    %v1379 = vadd.f32 %v1377, %v1378
    %v1380 = vld [vmem:[%s226] sm:$0x3]
    %1382 = vrot.lane.b32.xlu0 %v1379, 96
    %v1383 = vpop.permute.xlu0 %1382
    %v1384 = vsel %vm281, %v1383, 0
    %1386 = vmatpush.msra.mxu0 0.0
    %1387 = vmatpush.msra.mxu0 0.0
    %1388 = vmatpush.msra.mxu0 0.0
    %1389 = vmatpush.msra.mxu0 0.0
    %1390 = vmatpush.msra.mxu0 0.0
    %1391 = vmatpush.msra.mxu0 0.0
    %1392 = vmatpush.msra.mxu0 0.0
    %1393 = vmatpush.msra.mxu0 0.0
    %1394 = vmatpush.msra.mxu0 0.0
    %1395 = vmatpush.msra.mxu0 0.0
    %1396 = vmatpush.msra.mxu0 0.0
    %1397 = vmatpush.msra.mxu0 0.0
    %1398 = vmatpush.msra.mxu0 %v844
    %1399 = vmatpush.msra.mxu0 %v843
    %1400 = vmatpush.msra.mxu0 %v842
    %1401 = vmatpush.msra.mxu0 %v841
    %1402 = vmatmul.f32.gmra.mxu0 %v1384
    %v1403 = vpop.f32.mrf.mxu0
    %v1404 = vadd.f32 0.0, %v1403
    %1405 = vdwg.mxu0
    %v1406 = vadd.f32 %v1380, %v1404
    %v1407 = vxor.u32 %v1406, 2147483648
    %v1408 = vmul.f32 %v1407, 1.442695
    %v1409 = vpow.pop %v1408
    %v1410 = vadd.f32 %v1409, 1.0
    %v1411 = vrcp.pop %v1410
    %v1412 = vmul.f32 %v1410, %v1411
    %v1413 = vsub.f32 1.0, %v1412
    %v1414 = vmul.f32 %v1411, %v1413
    %v1415 = vadd.f32 %v1411, %v1414
    %vm1416 = vweird.f32 %v1410
    %vm1417 = vweird.f32 %v1411
    %vm1418 = vmor %vm1416, %vm1417
    %v1419 = vsel %vm1418, %v1411, %v1415
    %v1420 = vand.u32 2147483647, %v1410
    %vm1421 = vcmp.eq.f32.partialorder %v1420, 8.507059e+37
    %v1422 = vand.u32 %v1410, 2147483648
    %v1423 = vor.u32 1.1754944e-38, %v1422
    %v1424 = vsel %vm1421, %v1423, %v1419
    %v1425 = vmul.f32 1.0, %v1424
    %v1426 = vadd.f32 %v1404, %v1094
    %1428 = vrot.lane.b32.xlu0 %v1426, 64
    %v1429 = vpop.permute.xlu0 %1428
    %v1431 = vmul.f32 %v1425, %v1429
    %1433 = vrot.lane.b32.xlu0 %v1431, 64
    %v1434 = vpop.permute.xlu0 %1433
    %v1436 = vadd.f32 %v1380, %v1434
    %v1437 = vtanh.pop %v1436
    %v1438 = vsub.f32 1.0, %v1425
    %1440 = vrot.lane.b32.xlu0 %v1437, 96
    %v1441 = vpop.permute.xlu0 %1440
    %v1443 = vmul.f32 %v1438, %v1441
    %v1444 = vmul.f32 %v1425, %v1379
    %v1445 = vadd.f32 %v1443, %v1444
    %v1446 = vld [vmem:[%s252] sm:$0x3]
    %1448 = vrot.lane.b32.xlu0 %v1445, 96
    %v1449 = vpop.permute.xlu0 %1448
    %v1450 = vsel %vm281, %v1449, 0
    %1452 = vmatpush.msra.mxu0 0.0
    %1453 = vmatpush.msra.mxu0 0.0
    %1454 = vmatpush.msra.mxu0 0.0
    %1455 = vmatpush.msra.mxu0 0.0
    %1456 = vmatpush.msra.mxu0 0.0
    %1457 = vmatpush.msra.mxu0 0.0
    %1458 = vmatpush.msra.mxu0 0.0
    %1459 = vmatpush.msra.mxu0 0.0
    %1460 = vmatpush.msra.mxu0 0.0
    %1461 = vmatpush.msra.mxu0 0.0
    %1462 = vmatpush.msra.mxu0 0.0
    %1463 = vmatpush.msra.mxu0 0.0
    %1464 = vmatpush.msra.mxu0 %v844
    %1465 = vmatpush.msra.mxu0 %v843
    %1466 = vmatpush.msra.mxu0 %v842
    %1467 = vmatpush.msra.mxu0 %v841
    %1468 = vmatmul.f32.gmra.mxu0 %v1450
    %v1469 = vpop.f32.mrf.mxu0
    %v1470 = vadd.f32 0.0, %v1469
    %1471 = vdwg.mxu0
    %v1472 = vadd.f32 %v1446, %v1470
    %v1473 = vxor.u32 %v1472, 2147483648
    %v1474 = vmul.f32 %v1473, 1.442695
    %v1475 = vpow.pop %v1474
    %v1476 = vadd.f32 %v1475, 1.0
    %v1477 = vrcp.pop %v1476
    %v1478 = vmul.f32 %v1476, %v1477
    %v1479 = vsub.f32 1.0, %v1478
    %v1480 = vmul.f32 %v1477, %v1479
    %v1481 = vadd.f32 %v1477, %v1480
    %vm1482 = vweird.f32 %v1476
    %vm1483 = vweird.f32 %v1477
    %vm1484 = vmor %vm1482, %vm1483
    %v1485 = vsel %vm1484, %v1477, %v1481
    %v1486 = vand.u32 2147483647, %v1476
    %vm1487 = vcmp.eq.f32.partialorder %v1486, 8.507059e+37
    %v1488 = vand.u32 %v1476, 2147483648
    %v1489 = vor.u32 1.1754944e-38, %v1488
    %v1490 = vsel %vm1487, %v1489, %v1485
    %v1491 = vmul.f32 1.0, %v1490
    %v1492 = vadd.f32 %v1470, %v1094
    %1494 = vrot.lane.b32.xlu0 %v1492, 64
    %v1495 = vpop.permute.xlu0 %1494
    %v1497 = vmul.f32 %v1491, %v1495
    %1499 = vrot.lane.b32.xlu0 %v1497, 64
    %v1500 = vpop.permute.xlu0 %1499
    %v1502 = vadd.f32 %v1446, %v1500
    %v1503 = vtanh.pop %v1502
    %v1504 = vsub.f32 1.0, %v1491
    %1506 = vrot.lane.b32.xlu0 %v1503, 96
    %v1507 = vpop.permute.xlu0 %1506
    %v1509 = vmul.f32 %v1504, %v1507
    %v1510 = vmul.f32 %v1491, %v1445
    %v1511 = vadd.f32 %v1509, %v1510
    %v1512 = vld [vmem:[%s278] sm:$0x3]
    %1514 = vrot.lane.b32.xlu0 %v1511, 96
    %v1515 = vpop.permute.xlu0 %1514
    %v1516 = vsel %vm281, %v1515, 0
    %1518 = vmatpush.msra.mxu0 0.0
    %1519 = vmatpush.msra.mxu0 0.0
    %1520 = vmatpush.msra.mxu0 0.0
    %1521 = vmatpush.msra.mxu0 0.0
    %1522 = vmatpush.msra.mxu0 0.0
    %1523 = vmatpush.msra.mxu0 0.0
    %1524 = vmatpush.msra.mxu0 0.0
    %1525 = vmatpush.msra.mxu0 0.0
    %1526 = vmatpush.msra.mxu0 0.0
    %1527 = vmatpush.msra.mxu0 0.0
    %1528 = vmatpush.msra.mxu0 0.0
    %1529 = vmatpush.msra.mxu0 0.0
    %1530 = vmatpush.msra.mxu0 %v844
    %1531 = vmatpush.msra.mxu0 %v843
    %1532 = vmatpush.msra.mxu0 %v842
    %1533 = vmatpush.msra.mxu0 %v841
    %1534 = vmatmul.f32.gmra.mxu0 %v1516
    %v1535 = vpop.f32.mrf.mxu0
    %v1536 = vadd.f32 0.0, %v1535
    %1537 = vdwg.mxu0
    %v1538 = vadd.f32 %v1512, %v1536
    %v1539 = vxor.u32 %v1538, 2147483648
    %v1540 = vmul.f32 %v1539, 1.442695
    %v1541 = vpow.pop %v1540
    %v1542 = vadd.f32 %v1541, 1.0
    %v1543 = vrcp.pop %v1542
    %v1544 = vmul.f32 %v1542, %v1543
    %v1545 = vsub.f32 1.0, %v1544
    %v1546 = vmul.f32 %v1543, %v1545
    %v1547 = vadd.f32 %v1543, %v1546
    %vm1548 = vweird.f32 %v1542
    %vm1549 = vweird.f32 %v1543
    %vm1550 = vmor %vm1548, %vm1549
    %v1551 = vsel %vm1550, %v1543, %v1547
    %v1552 = vand.u32 2147483647, %v1542
    %vm1553 = vcmp.eq.f32.partialorder %v1552, 8.507059e+37
    %v1554 = vand.u32 %v1542, 2147483648
    %v1555 = vor.u32 1.1754944e-38, %v1554
    %v1556 = vsel %vm1553, %v1555, %v1551
    %v1557 = vmul.f32 1.0, %v1556
    %v1558 = vadd.f32 %v1536, %v1094
    %1560 = vrot.lane.b32.xlu0 %v1558, 64
    %v1561 = vpop.permute.xlu0 %1560
    %v1563 = vmul.f32 %v1557, %v1561
    %1565 = vrot.lane.b32.xlu0 %v1563, 64
    %v1566 = vpop.permute.xlu0 %1565
    %v1568 = vadd.f32 %v1512, %v1566
    %v1569 = vtanh.pop %v1568
    %v1570 = vsub.f32 1.0, %v1557
    %1572 = vrot.lane.b32.xlu0 %v1569, 96
    %v1573 = vpop.permute.xlu0 %1572
    %v1575 = vmul.f32 %v1570, %v1573
    %v1576 = vmul.f32 %v1557, %v1511
    %v1577 = vadd.f32 %v1575, %v1576
    %v1578 = vld [vmem:[%s9] sm:$0xff]
    %v1579 = vld [vmem:[%s9 + $0x8] sm:$0xff]
    %v1580 = vld [vmem:[%s9 + $0x10] sm:$0xff]
    %v1581 = vld [vmem:[%s9 + $0x18] sm:$0xff]
    %v1582 = vld [vmem:[%s10] sm:$0x1]
    %v1584 = vperm.slane %v1582, 0
    %1587 = vrot.lane.b32.xlu0 %v1577, 96
    %v1588 = vpop.permute.xlu0 %1587
    %v1589 = vsel %vm281, %v1588, 0
    %1591 = vmatpush.msra.mxu0 0.0
    %1592 = vmatpush.msra.mxu0 0.0
    %1593 = vmatpush.msra.mxu0 0.0
    %1594 = vmatpush.msra.mxu0 0.0
    %1595 = vmatpush.msra.mxu0 0.0
    %1596 = vmatpush.msra.mxu0 0.0
    %1597 = vmatpush.msra.mxu0 0.0
    %1598 = vmatpush.msra.mxu0 0.0
    %1599 = vmatpush.msra.mxu0 0.0
    %1600 = vmatpush.msra.mxu0 0.0
    %1601 = vmatpush.msra.mxu0 0.0
    %1602 = vmatpush.msra.mxu0 0.0
    %1603 = vmatpush.msra.mxu0 %v1581
    %1604 = vmatpush.msra.mxu0 %v1580
    %1605 = vmatpush.msra.mxu0 %v1579
    %1606 = vmatpush.msra.mxu0 %v1578
    %1607 = vmatmul.f32.gmra.mxu0 %v1589
    %v1608 = vpop.f32.mrf.mxu0
    %v1609 = vadd.f32 %v1584, %v1608
    %1610 = vdwg.mxu0
    %vm1611 = vcmask 17408
    %1612 = vst.msk [vmem:[#allocation7] sm:$0x3] %vm1611, %v1609
    // Predicated region
    $region50: #{gru_model_forward.1} parent=1 // pred_check
      _
    $region51: #{gru_model_forward.1} parent=1 // pred_check_branch
      %1614 = sbr.rel (0) target = $region53
    $region52: #{gru_model_forward.1} parent=1 // pred_region
      %1616 = vsyncadd [#allocation6], 0
      %s1618 = sshll.u32 [#allocation7], 4
      %s1619 = int_to_ptr.vmem [resolvable:$true] %s1618
      %s1620 = sshll.u32 %s11, 4
      %s1621 = int_to_ptr.hbm [resolvable:$true] %s1620
      %1623 = dma.vmem_to_hbm [thread:$0]  %s1619, 32, %s1621, [#allocation6]
    $region53: #{gru_model_forward.1} parent=1 // pred_fallthru
      _
    // Predicated region
    $region54: #{gru_model_forward.1} parent=1 // pred_check
      _
    $region55: #{gru_model_forward.1} parent=1 // pred_check_branch
      %1625 = sbr.rel (0) target = $region57
    $region56: #{gru_model_forward.1} parent=1 // pred_region
      %1627 = dma.done [#allocation6], 32
    $region57: #{gru_model_forward.1} parent=1 // pred_fallthru
      _
    %1628 = vsyncpa [#allocation5], 1
    %1629 = vsyncpa [#allocation6], 1

</llo_original>
